<compile_context>
chip_gen: v7x
topology: tpu7x:2x2x1
jax: 0.10.0
libtpu: 0.0.40
codegen_flags: <defaults>
</compile_context>

<pallas_src>
import functools

import jax
import jax.numpy as jnp
from jax.experimental import pallas as pl
from jax.experimental.pallas import tpu as pltpu  # noqa: F401  (TPU backend assumed)

# ---- small DistilBERT-like config ----
VOCAB = 100
MAX_POS = 16
HIDDEN = 32
N_HEADS = 2
HEAD_DIM = HIDDEN // N_HEADS
FFN = 64
N_LAYERS = 2
EPS = 1e-12
LANES = 128
HEAD_PAD = LANES  # merged classifier head padded to a full 128-lane slab

# ---- packed per-layer slab layout: [LSLAB_ROWS, 128] per layer ----
W_QKV_ROW = 0                 # rows 0:H,        lanes 0:3H   (Q block pre-scaled)
W_O_ROW = HIDDEN              # rows H:2H,       lanes 0:H
W_1_ROW = 2 * HIDDEN          # rows 2H:3H,      lanes 0:FFN
W_2_ROW = 3 * HIDDEN          # rows 3H:3H+FFN,  lanes 0:H
VEC_ROW = 3 * HIDDEN + FFN    # 8 vector rows follow:
V_BQKV, V_BO, V_SA_G, V_SA_B, V_B1, V_B2, V_OUT_G, V_OUT_B = range(8)
LSLAB_ROWS = VEC_ROW + 8      # 168 (multiple of 8)

# ---- packed global slab layout: [GSLAB_ROWS, 128] ----
G_WHEAD_ROW = 0               # rows 0:H, lanes 0:3 personal W, 3:6 economic W
G_EMB_G_ROW = HIDDEN          # embedding LN gamma, lanes 0:H
G_EMB_B_ROW = HIDDEN + 1      # embedding LN beta,  lanes 0:H
G_BHEAD_ROW = HIDDEN + 2      # merged head bias,   lanes 0:128
GSLAB_ROWS = 40               # rounded up to a multiple of 8


def _full_spec(shape):
    # whole-array block (satisfies the (8,128) rule by matching full dims)
    return pl.BlockSpec(shape, lambda: (0,) * len(shape))


def _ln(x, g, b):
    mu = jnp.mean(x, axis=-1, keepdims=True)
    var = jnp.mean(jnp.square(x - mu), axis=-1, keepdims=True)
    return (x - mu) * jax.lax.rsqrt(var + EPS) * g + b


# ---------------- single fused Pallas kernel ----------------

def _fused_forward_kernel(h0_ref, kbias_ref, gslab_ref, lslab_ref, logits_ref,
                          *, batch, seq):
    n_tok = batch * seq
    gs = gslab_ref[...]                                          # [40, 128]

    # embedding LayerNorm (embedding dropout = identity at inference)
    h = _ln(h0_ref[...].astype(jnp.float32),
            gs[G_EMB_G_ROW:G_EMB_G_ROW + 1, 0:HIDDEN],
            gs[G_EMB_B_ROW:G_EMB_B_ROW + 1, 0:HIDDEN])

    # Block-diagonal (same-sequence) + key-padding additive mask, built in-kernel
    # from a [1, n_tok] key bias (no dense (B*S)^2 mask input).
    r = jax.lax.broadcasted_iota(jnp.int32, (n_tok, n_tok), 0).astype(jnp.float32)
    c = jax.lax.broadcasted_iota(jnp.int32, (n_tok, n_tok), 1).astype(jnp.float32)
    inv_seq = 1.0 / float(seq)
    same_seq = jnp.floor((r + 0.5) * inv_seq) == jnp.floor((c + 0.5) * inv_seq)
    mask = jnp.where(same_seq, 0.0, -1e9) + kbias_ref[...]       # [n_tok, n_tok]

    for l in range(N_LAYERS):                                    # static unroll
        wl = lslab_ref[l]                                        # [168, 128]
        wqkv = wl[W_QKV_ROW:W_QKV_ROW + HIDDEN, 0:3 * HIDDEN]    # Q block pre-scaled
        wo = wl[W_O_ROW:W_O_ROW + HIDDEN, 0:HIDDEN]
        w1 = wl[W_1_ROW:W_1_ROW + HIDDEN, 0:FFN]
        w2 = wl[W_2_ROW:W_2_ROW + FFN, 0:HIDDEN]
        bqkv = wl[VEC_ROW + V_BQKV:VEC_ROW + V_BQKV + 1, 0:3 * HIDDEN]
        bo = wl[VEC_ROW + V_BO:VEC_ROW + V_BO + 1, 0:HIDDEN]
        sa_g = wl[VEC_ROW + V_SA_G:VEC_ROW + V_SA_G + 1, 0:HIDDEN]
        sa_b = wl[VEC_ROW + V_SA_B:VEC_ROW + V_SA_B + 1, 0:HIDDEN]
        b1 = wl[VEC_ROW + V_B1:VEC_ROW + V_B1 + 1, 0:FFN]
        b2 = wl[VEC_ROW + V_B2:VEC_ROW + V_B2 + 1, 0:HIDDEN]
        out_g = wl[VEC_ROW + V_OUT_G:VEC_ROW + V_OUT_G + 1, 0:HIDDEN]
        out_b = wl[VEC_ROW + V_OUT_B:VEC_ROW + V_OUT_B + 1, 0:HIDDEN]

        # fused QKV projection (1/sqrt(head_dim) already folded into Q weight/bias)
        qkv = jnp.dot(h, wqkv, preferred_element_type=jnp.float32) + bqkv

        # multi-head attention: per-head 2-D MXU matmuls over ALL tokens;
        # per-head accumulation against row blocks of wo (no lane concat)
        attn_out = jnp.zeros((n_tok, HIDDEN), jnp.float32)
        for hh in range(N_HEADS):                                # unrolled: N_HEADS = 2
            lo = hh * HEAD_DIM
            q_h = qkv[:, lo:lo + HEAD_DIM]
            k_h = qkv[:, HIDDEN + lo:HIDDEN + lo + HEAD_DIM]
            v_h = qkv[:, 2 * HIDDEN + lo:2 * HIDDEN + lo + HEAD_DIM]
            s = jax.lax.dot_general(q_h, k_h, (((1,), (1,)), ((), ())),
                                    preferred_element_type=jnp.float32)
            s = s + mask
            s = s - jnp.max(s, axis=-1, keepdims=True)
            p = jnp.exp(s)
            p = p * pl.reciprocal(jnp.sum(p, axis=-1, keepdims=True), approx=True)
            ctx_h = jnp.dot(p, v_h, preferred_element_type=jnp.float32)
            attn_out = attn_out + jnp.dot(ctx_h, wo[lo:lo + HEAD_DIM, :],
                                          preferred_element_type=jnp.float32)
        h = _ln(h + attn_out + bo, sa_g, sa_b)

        # ---- feed-forward ----
        ff = jnp.dot(h, w1, preferred_element_type=jnp.float32) + b1
        # TODO(synk): HF DistilBERT uses exact erf-GELU; tanh approximation used here.
        ff = jax.nn.gelu(ff, approximate=True)
        ff = jnp.dot(ff, w2, preferred_element_type=jnp.float32) + b2
        h = _ln(h + ff, out_g, out_b)

    # CLS pooling (token 0 of each sequence) via a one-hot selection matmul (MXU,
    # no per-row sublane extracts / concat); padded rows >= batch select nothing.
    n_rows = logits_ref.shape[0]
    rsel = jax.lax.broadcasted_iota(jnp.int32, (n_rows, n_tok), 0)
    csel = jax.lax.broadcasted_iota(jnp.int32, (n_rows, n_tok), 1)
    sel = (csel == rsel * seq).astype(jnp.float32)               # [n_rows, n_tok]
    pooled = jnp.dot(sel, h, preferred_element_type=jnp.float32)  # [n_rows, H]
    # classifier dropout(0.1): identity at inference

    # merged classifier heads (cols 0..2 personal, 3..5 economic), lane-dense store
    logits_ref[...] = (
        jnp.dot(pooled, gs[G_WHEAD_ROW:G_WHEAD_ROW + HIDDEN, :],
                preferred_element_type=jnp.float32)
        + gs[G_BHEAD_ROW:G_BHEAD_ROW + 1, :]).astype(logits_ref.dtype)


# ---------------- parameters (packed slabs built once at init) ----------------

def init_params(key):
    def normal(k, shape):
        return jax.random.normal(k, shape, jnp.float32) * 0.02

    keys = jax.random.split(key, 4)
    q_scale = 1.0 / (HEAD_DIM ** 0.5)

    lslab = jnp.zeros((N_LAYERS, LSLAB_ROWS, LANES), jnp.float32)
    for i in range(N_LAYERS):
        lk = jax.random.split(jax.random.fold_in(key, 100 + i), 6)
        # 1/sqrt(head_dim) folded into the Q projection (its bias is zero here;
        # a nonzero Q bias would be scaled identically).
        wq = normal(lk[0], (HIDDEN, HIDDEN)) * q_scale
        wk = normal(lk[1], (HIDDEN, HIDDEN))
        wv = normal(lk[2], (HIDDEN, HIDDEN))
        lslab = lslab.at[i, W_QKV_ROW:W_QKV_ROW + HIDDEN, 0:3 * HIDDEN].set(
            jnp.concatenate([wq, wk, wv], axis=1))
        lslab = lslab.at[i, W_O_ROW:W_O_ROW + HIDDEN, 0:HIDDEN].set(
            normal(lk[3], (HIDDEN, HIDDEN)))
        lslab = lslab.at[i, W_1_ROW:W_1_ROW + HIDDEN, 0:FFN].set(
            normal(lk[4], (HIDDEN, FFN)))
        lslab = lslab.at[i, W_2_ROW:W_2_ROW + FFN, 0:HIDDEN].set(
            normal(lk[5], (FFN, HIDDEN)))
        # projection / FFN biases = 0; LayerNorm gamma = 1, beta = 0
        lslab = lslab.at[i, VEC_ROW + V_SA_G, 0:HIDDEN].set(1.0)
        lslab = lslab.at[i, VEC_ROW + V_OUT_G, 0:HIDDEN].set(1.0)

    gslab = jnp.zeros((GSLAB_ROWS, LANES), jnp.float32)
    gslab = gslab.at[G_WHEAD_ROW:G_WHEAD_ROW + HIDDEN, 0:3].set(
        normal(keys[2], (HIDDEN, 3)))        # fc_personal weight
    gslab = gslab.at[G_WHEAD_ROW:G_WHEAD_ROW + HIDDEN, 3:6].set(
        normal(keys[3], (HIDDEN, 3)))        # fc_economic weight
    gslab = gslab.at[G_EMB_G_ROW, 0:HIDDEN].set(1.0)   # embedding LN gamma
    # embedding LN beta and both classifier biases remain zero

    return {
        "word_emb": normal(keys[0], (VOCAB, HIDDEN)),
        "pos_emb": normal(keys[1], (MAX_POS, HIDDEN)),
        "gslab": gslab,                                 # [40, 128]
        "lslab": lslab,                                 # [L, 168, 128]
    }


# ---------------- forward (embedding gather in JAX, everything else fused) ----

def liberty_predictor_forward(params, input_ids, attention_mask):
    B, S = input_ids.shape
    assert S <= MAX_POS, f"sequence length {S} exceeds MAX_POS={MAX_POS}"
    BS = B * S
    b_pad = max(8, pl.cdiv(B, 8) * 8)      # sublane-dense output store

    # token + position embeddings (tiny gather kept as JAX glue)
    # TODO(synk): at real sizes move the gather in-kernel via
    # PrefetchScalarGridSpec + pl.Element row-gather to avoid the h0 HBM round trip.
    h0 = (params["word_emb"][input_ids]
          + params["pos_emb"][jnp.arange(S)][None, :, :]).reshape(BS, HIDDEN)

    # per-key additive padding bias (block-diagonal part is built in-kernel)
    key_bias = jnp.where(attention_mask.reshape(1, BS) > 0, 0.0, -1e9).astype(jnp.float32)

    kernel = functools.partial(_fused_forward_kernel, batch=B, seq=S)
    logits = pl.pallas_call(
        kernel,
        out_shape=jax.ShapeDtypeStruct((b_pad, HEAD_PAD), jnp.float32),
        in_specs=[
            _full_spec((BS, HIDDEN)),                    # h0
            _full_spec((1, BS)),                         # key padding bias
            _full_spec((GSLAB_ROWS, LANES)),             # global slab
            _full_spec((N_LAYERS, LSLAB_ROWS, LANES)),   # per-layer slab
        ],
        out_specs=_full_spec((b_pad, HEAD_PAD)),
    )(h0, key_bias, params["gslab"], params["lslab"])

    personal = logits[:B, 0:3]
    economic = logits[:B, 3:6]
    return personal, economic


if __name__ == "__main__":
    key = jax.random.PRNGKey(0)
    pkey, ikey = jax.random.split(key)
    params = init_params(pkey)

    B, S = 2, 8
    input_ids = jax.random.randint(ikey, (B, S), 0, VOCAB, dtype=jnp.int32)
    attention_mask = jnp.ones((B, S), jnp.int32).at[1, 6:].set(0)

    fwd = jax.jit(liberty_predictor_forward)
    personal, economic = fwd(params, input_ids, attention_mask)
    jax.block_until_ready((personal, economic))

    assert personal.shape == (B, 3) and economic.shape == (B, 3)
    assert personal.dtype == jnp.float32 and economic.dtype == jnp.float32
    assert bool(jnp.all(jnp.isfinite(personal))) and bool(jnp.all(jnp.isfinite(economic)))
    print("KERNEL_OK")
</pallas_src>

<mosaic_0001>
module attributes {stable_mosaic.version = 11 : i64} {
  func.func @_fused_forward_kernel(%arg0: memref<16x32xf32, #tpu.memory_space<vmem>>, %arg1: memref<1x16xf32, #tpu.memory_space<vmem>>, %arg2: memref<40x128xf32, #tpu.memory_space<vmem>>, %arg3: memref<2x168x128xf32, #tpu.memory_space<vmem>>, %arg4: memref<8x128xf32, #tpu.memory_space<vmem>>) attributes {dimension_semantics = [], scalar_prefetch = 0 : i64, scratch_operands = 0 : i64, tpu.core_type = #tpu.core_type<tc>} {
    %c0 = arith.constant 0 : index
    %c0_0 = arith.constant 0 : index
    %0 = vector.load %arg2[%c0, %c0_0] : memref<40x128xf32, #tpu.memory_space<vmem>>, vector<40x128xf32>
    %c0_1 = arith.constant 0 : index
    %c0_2 = arith.constant 0 : index
    %1 = vector.load %arg0[%c0_1, %c0_2] : memref<16x32xf32, #tpu.memory_space<vmem>>, vector<16x32xf32>
    %2 = vector.extract_strided_slice %0 {offsets = [32, 0], sizes = [1, 32], strides = [1, 1]} : vector<40x128xf32> to vector<1x32xf32>
    %3 = vector.extract_strided_slice %0 {offsets = [33, 0], sizes = [1, 32], strides = [1, 1]} : vector<40x128xf32> to vector<1x32xf32>
    %cst = arith.constant dense<0.000000e+00> : vector<16xf32>
    %4 = vector.multi_reduction <add>, %1, %cst [1] : vector<16x32xf32> to vector<16xf32>
    %5 = vector.shape_cast %4 : vector<16xf32> to vector<16x1xf32>
    %cst_3 = arith.constant 3.200000e+01 : f32
    %6 = vector.broadcast %cst_3 : f32 to vector<16x1xf32>
    %7 = arith.divf %5, %6 : vector<16x1xf32>
    %8 = vector.broadcast %7 : vector<16x1xf32> to vector<16x32xf32>
    %9 = arith.subf %1, %8 : vector<16x32xf32>
    %10 = arith.mulf %9, %9 : vector<16x32xf32>
    %cst_4 = arith.constant dense<0.000000e+00> : vector<16xf32>
    %11 = vector.multi_reduction <add>, %10, %cst_4 [1] : vector<16x32xf32> to vector<16xf32>
    %12 = vector.shape_cast %11 : vector<16xf32> to vector<16x1xf32>
    %cst_5 = arith.constant 3.200000e+01 : f32
    %13 = vector.broadcast %cst_5 : f32 to vector<16x1xf32>
    %14 = arith.divf %12, %13 : vector<16x1xf32>
    %15 = vector.broadcast %7 : vector<16x1xf32> to vector<16x32xf32>
    %16 = arith.subf %1, %15 : vector<16x32xf32>
    %cst_6 = arith.constant 9.99999996E-13 : f32
    %17 = vector.broadcast %cst_6 : f32 to vector<16x1xf32>
    %18 = arith.addf %14, %17 : vector<16x1xf32>
    %19 = math.rsqrt %18 : vector<16x1xf32>
    %20 = vector.broadcast %19 : vector<16x1xf32> to vector<16x32xf32>
    %21 = arith.mulf %16, %20 : vector<16x32xf32>
    %22 = vector.broadcast %2 : vector<1x32xf32> to vector<16x32xf32>
    %23 = arith.mulf %21, %22 : vector<16x32xf32>
    %24 = vector.broadcast %3 : vector<1x32xf32> to vector<16x32xf32>
    %25 = arith.addf %23, %24 : vector<16x32xf32>
    %26 = tpu.iota {dimensions = array<i32: 0>} : vector<16x16xi32>
    %27 = arith.sitofp %26 : vector<16x16xi32> to vector<16x16xf32>
    %28 = tpu.iota {dimensions = array<i32: 1>} : vector<16x16xi32>
    %29 = arith.sitofp %28 : vector<16x16xi32> to vector<16x16xf32>
    %cst_7 = arith.constant 5.000000e-01 : f32
    %30 = vector.broadcast %cst_7 : f32 to vector<16x16xf32>
    %31 = arith.addf %27, %30 : vector<16x16xf32>
    %cst_8 = arith.constant 1.250000e-01 : f32
    %32 = vector.broadcast %cst_8 : f32 to vector<16x16xf32>
    %33 = arith.mulf %31, %32 : vector<16x16xf32>
    %34 = math.floor %33 : vector<16x16xf32>
    %cst_9 = arith.constant 5.000000e-01 : f32
    %35 = vector.broadcast %cst_9 : f32 to vector<16x16xf32>
    %36 = arith.addf %29, %35 : vector<16x16xf32>
    %cst_10 = arith.constant 1.250000e-01 : f32
    %37 = vector.broadcast %cst_10 : f32 to vector<16x16xf32>
    %38 = arith.mulf %36, %37 : vector<16x16xf32>
    %39 = math.floor %38 : vector<16x16xf32>
    %40 = arith.cmpf oeq, %34, %39 : vector<16x16xf32>
    %cst_11 = arith.constant 0.000000e+00 : f32
    %cst_12 = arith.constant -1.000000e+09 : f32
    %41 = vector.broadcast %cst_11 : f32 to vector<16x16xf32>
    %42 = vector.broadcast %cst_12 : f32 to vector<16x16xf32>
    %43 = arith.select %40, %41, %42 : vector<16x16xi1>, vector<16x16xf32>
    %c0_13 = arith.constant 0 : index
    %c0_14 = arith.constant 0 : index
    %44 = vector.load %arg1[%c0_13, %c0_14] : memref<1x16xf32, #tpu.memory_space<vmem>>, vector<1x16xf32>
    %45 = vector.broadcast %44 : vector<1x16xf32> to vector<16x16xf32>
    %46 = arith.addf %43, %45 : vector<16x16xf32>
    %c0_15 = arith.constant 0 : index
    %c0_16 = arith.constant 0 : index
    %c0_17 = arith.constant 0 : index
    %47 = vector.load %arg3[%c0_15, %c0_16, %c0_17] : memref<2x168x128xf32, #tpu.memory_space<vmem>>, vector<1x168x128xf32>
    %48 = vector.shape_cast %47 : vector<1x168x128xf32> to vector<168x128xf32>
    %49 = vector.extract_strided_slice %48 {offsets = [0, 0], sizes = [32, 96], strides = [1, 1]} : vector<168x128xf32> to vector<32x96xf32>
    %50 = vector.extract_strided_slice %48 {offsets = [32, 0], sizes = [32, 32], strides = [1, 1]} : vector<168x128xf32> to vector<32x32xf32>
    %51 = vector.extract_strided_slice %48 {offsets = [64, 0], sizes = [32, 64], strides = [1, 1]} : vector<168x128xf32> to vector<32x64xf32>
    %52 = vector.extract_strided_slice %48 {offsets = [96, 0], sizes = [64, 32], strides = [1, 1]} : vector<168x128xf32> to vector<64x32xf32>
    %53 = vector.extract_strided_slice %48 {offsets = [160, 0], sizes = [1, 96], strides = [1, 1]} : vector<168x128xf32> to vector<1x96xf32>
    %54 = vector.extract_strided_slice %48 {offsets = [161, 0], sizes = [1, 32], strides = [1, 1]} : vector<168x128xf32> to vector<1x32xf32>
    %55 = vector.extract_strided_slice %48 {offsets = [162, 0], sizes = [1, 32], strides = [1, 1]} : vector<168x128xf32> to vector<1x32xf32>
    %56 = vector.extract_strided_slice %48 {offsets = [163, 0], sizes = [1, 32], strides = [1, 1]} : vector<168x128xf32> to vector<1x32xf32>
    %57 = vector.extract_strided_slice %48 {offsets = [164, 0], sizes = [1, 64], strides = [1, 1]} : vector<168x128xf32> to vector<1x64xf32>
    %58 = vector.extract_strided_slice %48 {offsets = [165, 0], sizes = [1, 32], strides = [1, 1]} : vector<168x128xf32> to vector<1x32xf32>
    %59 = vector.extract_strided_slice %48 {offsets = [166, 0], sizes = [1, 32], strides = [1, 1]} : vector<168x128xf32> to vector<1x32xf32>
    %60 = vector.extract_strided_slice %48 {offsets = [167, 0], sizes = [1, 32], strides = [1, 1]} : vector<168x128xf32> to vector<1x32xf32>
    %cst_18 = arith.constant dense<0.000000e+00> : vector<16x96xf32>
    %61 = tpu.matmul %25, %49, %cst_18 {dimension_numbers = #tpu.dot_dimension_numbers<[1], [0], [0], [1], [0, 0, 1, 1], [], []>} : vector<16x32xf32>, vector<32x96xf32>, vector<16x96xf32> -> vector<16x96xf32>
    %62 = vector.broadcast %53 : vector<1x96xf32> to vector<16x96xf32>
    %63 = arith.addf %61, %62 : vector<16x96xf32>
    %cst_19 = arith.constant 0.000000e+00 : f32
    %64 = vector.broadcast %cst_19 : f32 to vector<16x32xf32>
    %65 = vector.extract_strided_slice %63 {offsets = [0, 0], sizes = [16, 16], strides = [1, 1]} : vector<16x96xf32> to vector<16x16xf32>
    %66 = vector.extract_strided_slice %63 {offsets = [0, 32], sizes = [16, 16], strides = [1, 1]} : vector<16x96xf32> to vector<16x16xf32>
    %67 = vector.extract_strided_slice %63 {offsets = [0, 64], sizes = [16, 16], strides = [1, 1]} : vector<16x96xf32> to vector<16x16xf32>
    %cst_20 = arith.constant dense<0.000000e+00> : vector<16x16xf32>
    %68 = tpu.matmul %65, %66, %cst_20 {dimension_numbers = #tpu.dot_dimension_numbers<[1], [1], [0], [0], [0, 0, 1, 0], [], []>} : vector<16x16xf32>, vector<16x16xf32>, vector<16x16xf32> -> vector<16x16xf32>
    %69 = arith.addf %68, %46 : vector<16x16xf32>
    %cst_21 = arith.constant dense<0xFF800000> : vector<16xf32>
    %70 = vector.multi_reduction <maximumf>, %69, %cst_21 [1] : vector<16x16xf32> to vector<16xf32>
    %71 = vector.shape_cast %70 : vector<16xf32> to vector<16x1xf32>
    %72 = vector.broadcast %71 : vector<16x1xf32> to vector<16x16xf32>
    %73 = arith.subf %69, %72 : vector<16x16xf32>
    %74 = math.exp %73 : vector<16x16xf32>
    %cst_22 = arith.constant dense<0.000000e+00> : vector<16xf32>
    %75 = vector.multi_reduction <add>, %74, %cst_22 [1] : vector<16x16xf32> to vector<16xf32>
    %76 = vector.shape_cast %75 : vector<16xf32> to vector<16x1xf32>
    %77 = tpu.reciprocal %76 {approx = true} : vector<16x1xf32> -> vector<16x1xf32>
    %78 = vector.broadcast %77 : vector<16x1xf32> to vector<16x16xf32>
    %79 = arith.mulf %74, %78 : vector<16x16xf32>
    %cst_23 = arith.constant dense<0.000000e+00> : vector<16x16xf32>
    %80 = tpu.matmul %79, %67, %cst_23 {dimension_numbers = #tpu.dot_dimension_numbers<[1], [0], [0], [1], [0, 0, 1, 1], [], []>} : vector<16x16xf32>, vector<16x16xf32>, vector<16x16xf32> -> vector<16x16xf32>
    %81 = vector.extract_strided_slice %50 {offsets = [0, 0], sizes = [16, 32], strides = [1, 1]} : vector<32x32xf32> to vector<16x32xf32>
    %cst_24 = arith.constant dense<0.000000e+00> : vector<16x32xf32>
    %82 = tpu.matmul %80, %81, %cst_24 {dimension_numbers = #tpu.dot_dimension_numbers<[1], [0], [0], [1], [0, 0, 1, 1], [], []>} : vector<16x16xf32>, vector<16x32xf32>, vector<16x32xf32> -> vector<16x32xf32>
    %83 = arith.addf %64, %82 : vector<16x32xf32>
    %84 = vector.extract_strided_slice %63 {offsets = [0, 16], sizes = [16, 16], strides = [1, 1]} : vector<16x96xf32> to vector<16x16xf32>
    %85 = vector.extract_strided_slice %63 {offsets = [0, 48], sizes = [16, 16], strides = [1, 1]} : vector<16x96xf32> to vector<16x16xf32>
    %86 = vector.extract_strided_slice %63 {offsets = [0, 80], sizes = [16, 16], strides = [1, 1]} : vector<16x96xf32> to vector<16x16xf32>
    %cst_25 = arith.constant dense<0.000000e+00> : vector<16x16xf32>
    %87 = tpu.matmul %84, %85, %cst_25 {dimension_numbers = #tpu.dot_dimension_numbers<[1], [1], [0], [0], [0, 0, 1, 0], [], []>} : vector<16x16xf32>, vector<16x16xf32>, vector<16x16xf32> -> vector<16x16xf32>
    %88 = arith.addf %87, %46 : vector<16x16xf32>
    %cst_26 = arith.constant dense<0xFF800000> : vector<16xf32>
    %89 = vector.multi_reduction <maximumf>, %88, %cst_26 [1] : vector<16x16xf32> to vector<16xf32>
    %90 = vector.shape_cast %89 : vector<16xf32> to vector<16x1xf32>
    %91 = vector.broadcast %90 : vector<16x1xf32> to vector<16x16xf32>
    %92 = arith.subf %88, %91 : vector<16x16xf32>
    %93 = math.exp %92 : vector<16x16xf32>
    %cst_27 = arith.constant dense<0.000000e+00> : vector<16xf32>
    %94 = vector.multi_reduction <add>, %93, %cst_27 [1] : vector<16x16xf32> to vector<16xf32>
    %95 = vector.shape_cast %94 : vector<16xf32> to vector<16x1xf32>
    %96 = tpu.reciprocal %95 {approx = true} : vector<16x1xf32> -> vector<16x1xf32>
    %97 = vector.broadcast %96 : vector<16x1xf32> to vector<16x16xf32>
    %98 = arith.mulf %93, %97 : vector<16x16xf32>
    %cst_28 = arith.constant dense<0.000000e+00> : vector<16x16xf32>
    %99 = tpu.matmul %98, %86, %cst_28 {dimension_numbers = #tpu.dot_dimension_numbers<[1], [0], [0], [1], [0, 0, 1, 1], [], []>} : vector<16x16xf32>, vector<16x16xf32>, vector<16x16xf32> -> vector<16x16xf32>
    %100 = vector.extract_strided_slice %50 {offsets = [16, 0], sizes = [16, 32], strides = [1, 1]} : vector<32x32xf32> to vector<16x32xf32>
    %cst_29 = arith.constant dense<0.000000e+00> : vector<16x32xf32>
    %101 = tpu.matmul %99, %100, %cst_29 {dimension_numbers = #tpu.dot_dimension_numbers<[1], [0], [0], [1], [0, 0, 1, 1], [], []>} : vector<16x16xf32>, vector<16x32xf32>, vector<16x32xf32> -> vector<16x32xf32>
    %102 = arith.addf %83, %101 : vector<16x32xf32>
    %103 = arith.addf %25, %102 : vector<16x32xf32>
    %104 = vector.broadcast %54 : vector<1x32xf32> to vector<16x32xf32>
    %105 = arith.addf %103, %104 : vector<16x32xf32>
    %cst_30 = arith.constant dense<0.000000e+00> : vector<16xf32>
    %106 = vector.multi_reduction <add>, %105, %cst_30 [1] : vector<16x32xf32> to vector<16xf32>
    %107 = vector.shape_cast %106 : vector<16xf32> to vector<16x1xf32>
    %cst_31 = arith.constant 3.200000e+01 : f32
    %108 = vector.broadcast %cst_31 : f32 to vector<16x1xf32>
    %109 = arith.divf %107, %108 : vector<16x1xf32>
    %110 = vector.broadcast %109 : vector<16x1xf32> to vector<16x32xf32>
    %111 = arith.subf %105, %110 : vector<16x32xf32>
    %112 = arith.mulf %111, %111 : vector<16x32xf32>
    %cst_32 = arith.constant dense<0.000000e+00> : vector<16xf32>
    %113 = vector.multi_reduction <add>, %112, %cst_32 [1] : vector<16x32xf32> to vector<16xf32>
    %114 = vector.shape_cast %113 : vector<16xf32> to vector<16x1xf32>
    %cst_33 = arith.constant 3.200000e+01 : f32
    %115 = vector.broadcast %cst_33 : f32 to vector<16x1xf32>
    %116 = arith.divf %114, %115 : vector<16x1xf32>
    %117 = vector.broadcast %109 : vector<16x1xf32> to vector<16x32xf32>
    %118 = arith.subf %105, %117 : vector<16x32xf32>
    %cst_34 = arith.constant 9.99999996E-13 : f32
    %119 = vector.broadcast %cst_34 : f32 to vector<16x1xf32>
    %120 = arith.addf %116, %119 : vector<16x1xf32>
    %121 = math.rsqrt %120 : vector<16x1xf32>
    %122 = vector.broadcast %121 : vector<16x1xf32> to vector<16x32xf32>
    %123 = arith.mulf %118, %122 : vector<16x32xf32>
    %124 = vector.broadcast %55 : vector<1x32xf32> to vector<16x32xf32>
    %125 = arith.mulf %123, %124 : vector<16x32xf32>
    %126 = vector.broadcast %56 : vector<1x32xf32> to vector<16x32xf32>
    %127 = arith.addf %125, %126 : vector<16x32xf32>
    %cst_35 = arith.constant dense<0.000000e+00> : vector<16x64xf32>
    %128 = tpu.matmul %127, %51, %cst_35 {dimension_numbers = #tpu.dot_dimension_numbers<[1], [0], [0], [1], [0, 0, 1, 1], [], []>} : vector<16x32xf32>, vector<32x64xf32>, vector<16x64xf32> -> vector<16x64xf32>
    %129 = vector.broadcast %57 : vector<1x64xf32> to vector<16x64xf32>
    %130 = arith.addf %128, %129 : vector<16x64xf32>
    %131 = arith.mulf %130, %130 : vector<16x64xf32>
    %132 = arith.mulf %130, %131 : vector<16x64xf32>
    %cst_36 = arith.constant 4.471500e-02 : f32
    %133 = vector.broadcast %cst_36 : f32 to vector<16x64xf32>
    %134 = arith.mulf %133, %132 : vector<16x64xf32>
    %135 = arith.addf %130, %134 : vector<16x64xf32>
    %cst_37 = arith.constant 0.797884583 : f32
    %136 = vector.broadcast %cst_37 : f32 to vector<16x64xf32>
    %137 = arith.mulf %136, %135 : vector<16x64xf32>
    %138 = math.tanh %137 : vector<16x64xf32>
    %cst_38 = arith.constant 1.000000e+00 : f32
    %139 = vector.broadcast %cst_38 : f32 to vector<16x64xf32>
    %140 = arith.addf %139, %138 : vector<16x64xf32>
    %cst_39 = arith.constant 5.000000e-01 : f32
    %141 = vector.broadcast %cst_39 : f32 to vector<16x64xf32>
    %142 = arith.mulf %141, %140 : vector<16x64xf32>
    %143 = arith.mulf %130, %142 : vector<16x64xf32>
    %cst_40 = arith.constant dense<0.000000e+00> : vector<16x32xf32>
    %144 = tpu.matmul %143, %52, %cst_40 {dimension_numbers = #tpu.dot_dimension_numbers<[1], [0], [0], [1], [0, 0, 1, 1], [], []>} : vector<16x64xf32>, vector<64x32xf32>, vector<16x32xf32> -> vector<16x32xf32>
    %145 = vector.broadcast %58 : vector<1x32xf32> to vector<16x32xf32>
    %146 = arith.addf %144, %145 : vector<16x32xf32>
    %147 = arith.addf %127, %146 : vector<16x32xf32>
    %cst_41 = arith.constant dense<0.000000e+00> : vector<16xf32>
    %148 = vector.multi_reduction <add>, %147, %cst_41 [1] : vector<16x32xf32> to vector<16xf32>
    %149 = vector.shape_cast %148 : vector<16xf32> to vector<16x1xf32>
    %cst_42 = arith.constant 3.200000e+01 : f32
    %150 = vector.broadcast %cst_42 : f32 to vector<16x1xf32>
    %151 = arith.divf %149, %150 : vector<16x1xf32>
    %152 = vector.broadcast %151 : vector<16x1xf32> to vector<16x32xf32>
    %153 = arith.subf %147, %152 : vector<16x32xf32>
    %154 = arith.mulf %153, %153 : vector<16x32xf32>
    %cst_43 = arith.constant dense<0.000000e+00> : vector<16xf32>
    %155 = vector.multi_reduction <add>, %154, %cst_43 [1] : vector<16x32xf32> to vector<16xf32>
    %156 = vector.shape_cast %155 : vector<16xf32> to vector<16x1xf32>
    %cst_44 = arith.constant 3.200000e+01 : f32
    %157 = vector.broadcast %cst_44 : f32 to vector<16x1xf32>
    %158 = arith.divf %156, %157 : vector<16x1xf32>
    %159 = vector.broadcast %151 : vector<16x1xf32> to vector<16x32xf32>
    %160 = arith.subf %147, %159 : vector<16x32xf32>
    %cst_45 = arith.constant 9.99999996E-13 : f32
    %161 = vector.broadcast %cst_45 : f32 to vector<16x1xf32>
    %162 = arith.addf %158, %161 : vector<16x1xf32>
    %163 = math.rsqrt %162 : vector<16x1xf32>
    %164 = vector.broadcast %163 : vector<16x1xf32> to vector<16x32xf32>
    %165 = arith.mulf %160, %164 : vector<16x32xf32>
    %166 = vector.broadcast %59 : vector<1x32xf32> to vector<16x32xf32>
    %167 = arith.mulf %165, %166 : vector<16x32xf32>
    %168 = vector.broadcast %60 : vector<1x32xf32> to vector<16x32xf32>
    %169 = arith.addf %167, %168 : vector<16x32xf32>
    %c1 = arith.constant 1 : index
    %c0_46 = arith.constant 0 : index
    %c0_47 = arith.constant 0 : index
    %170 = vector.load %arg3[%c1, %c0_46, %c0_47] : memref<2x168x128xf32, #tpu.memory_space<vmem>>, vector<1x168x128xf32>
    %171 = vector.shape_cast %170 : vector<1x168x128xf32> to vector<168x128xf32>
    %172 = vector.extract_strided_slice %171 {offsets = [0, 0], sizes = [32, 96], strides = [1, 1]} : vector<168x128xf32> to vector<32x96xf32>
    %173 = vector.extract_strided_slice %171 {offsets = [32, 0], sizes = [32, 32], strides = [1, 1]} : vector<168x128xf32> to vector<32x32xf32>
    %174 = vector.extract_strided_slice %171 {offsets = [64, 0], sizes = [32, 64], strides = [1, 1]} : vector<168x128xf32> to vector<32x64xf32>
    %175 = vector.extract_strided_slice %171 {offsets = [96, 0], sizes = [64, 32], strides = [1, 1]} : vector<168x128xf32> to vector<64x32xf32>
    %176 = vector.extract_strided_slice %171 {offsets = [160, 0], sizes = [1, 96], strides = [1, 1]} : vector<168x128xf32> to vector<1x96xf32>
    %177 = vector.extract_strided_slice %171 {offsets = [161, 0], sizes = [1, 32], strides = [1, 1]} : vector<168x128xf32> to vector<1x32xf32>
    %178 = vector.extract_strided_slice %171 {offsets = [162, 0], sizes = [1, 32], strides = [1, 1]} : vector<168x128xf32> to vector<1x32xf32>
    %179 = vector.extract_strided_slice %171 {offsets = [163, 0], sizes = [1, 32], strides = [1, 1]} : vector<168x128xf32> to vector<1x32xf32>
    %180 = vector.extract_strided_slice %171 {offsets = [164, 0], sizes = [1, 64], strides = [1, 1]} : vector<168x128xf32> to vector<1x64xf32>
    %181 = vector.extract_strided_slice %171 {offsets = [165, 0], sizes = [1, 32], strides = [1, 1]} : vector<168x128xf32> to vector<1x32xf32>
    %182 = vector.extract_strided_slice %171 {offsets = [166, 0], sizes = [1, 32], strides = [1, 1]} : vector<168x128xf32> to vector<1x32xf32>
    %183 = vector.extract_strided_slice %171 {offsets = [167, 0], sizes = [1, 32], strides = [1, 1]} : vector<168x128xf32> to vector<1x32xf32>
    %cst_48 = arith.constant dense<0.000000e+00> : vector<16x96xf32>
    %184 = tpu.matmul %169, %172, %cst_48 {dimension_numbers = #tpu.dot_dimension_numbers<[1], [0], [0], [1], [0, 0, 1, 1], [], []>} : vector<16x32xf32>, vector<32x96xf32>, vector<16x96xf32> -> vector<16x96xf32>
    %185 = vector.broadcast %176 : vector<1x96xf32> to vector<16x96xf32>
    %186 = arith.addf %184, %185 : vector<16x96xf32>
    %cst_49 = arith.constant 0.000000e+00 : f32
    %187 = vector.broadcast %cst_49 : f32 to vector<16x32xf32>
    %188 = vector.extract_strided_slice %186 {offsets = [0, 0], sizes = [16, 16], strides = [1, 1]} : vector<16x96xf32> to vector<16x16xf32>
    %189 = vector.extract_strided_slice %186 {offsets = [0, 32], sizes = [16, 16], strides = [1, 1]} : vector<16x96xf32> to vector<16x16xf32>
    %190 = vector.extract_strided_slice %186 {offsets = [0, 64], sizes = [16, 16], strides = [1, 1]} : vector<16x96xf32> to vector<16x16xf32>
    %cst_50 = arith.constant dense<0.000000e+00> : vector<16x16xf32>
    %191 = tpu.matmul %188, %189, %cst_50 {dimension_numbers = #tpu.dot_dimension_numbers<[1], [1], [0], [0], [0, 0, 1, 0], [], []>} : vector<16x16xf32>, vector<16x16xf32>, vector<16x16xf32> -> vector<16x16xf32>
    %192 = arith.addf %191, %46 : vector<16x16xf32>
    %cst_51 = arith.constant dense<0xFF800000> : vector<16xf32>
    %193 = vector.multi_reduction <maximumf>, %192, %cst_51 [1] : vector<16x16xf32> to vector<16xf32>
    %194 = vector.shape_cast %193 : vector<16xf32> to vector<16x1xf32>
    %195 = vector.broadcast %194 : vector<16x1xf32> to vector<16x16xf32>
    %196 = arith.subf %192, %195 : vector<16x16xf32>
    %197 = math.exp %196 : vector<16x16xf32>
    %cst_52 = arith.constant dense<0.000000e+00> : vector<16xf32>
    %198 = vector.multi_reduction <add>, %197, %cst_52 [1] : vector<16x16xf32> to vector<16xf32>
    %199 = vector.shape_cast %198 : vector<16xf32> to vector<16x1xf32>
    %200 = tpu.reciprocal %199 {approx = true} : vector<16x1xf32> -> vector<16x1xf32>
    %201 = vector.broadcast %200 : vector<16x1xf32> to vector<16x16xf32>
    %202 = arith.mulf %197, %201 : vector<16x16xf32>
    %cst_53 = arith.constant dense<0.000000e+00> : vector<16x16xf32>
    %203 = tpu.matmul %202, %190, %cst_53 {dimension_numbers = #tpu.dot_dimension_numbers<[1], [0], [0], [1], [0, 0, 1, 1], [], []>} : vector<16x16xf32>, vector<16x16xf32>, vector<16x16xf32> -> vector<16x16xf32>
    %204 = vector.extract_strided_slice %173 {offsets = [0, 0], sizes = [16, 32], strides = [1, 1]} : vector<32x32xf32> to vector<16x32xf32>
    %cst_54 = arith.constant dense<0.000000e+00> : vector<16x32xf32>
    %205 = tpu.matmul %203, %204, %cst_54 {dimension_numbers = #tpu.dot_dimension_numbers<[1], [0], [0], [1], [0, 0, 1, 1], [], []>} : vector<16x16xf32>, vector<16x32xf32>, vector<16x32xf32> -> vector<16x32xf32>
    %206 = arith.addf %187, %205 : vector<16x32xf32>
    %207 = vector.extract_strided_slice %186 {offsets = [0, 16], sizes = [16, 16], strides = [1, 1]} : vector<16x96xf32> to vector<16x16xf32>
    %208 = vector.extract_strided_slice %186 {offsets = [0, 48], sizes = [16, 16], strides = [1, 1]} : vector<16x96xf32> to vector<16x16xf32>
    %209 = vector.extract_strided_slice %186 {offsets = [0, 80], sizes = [16, 16], strides = [1, 1]} : vector<16x96xf32> to vector<16x16xf32>
    %cst_55 = arith.constant dense<0.000000e+00> : vector<16x16xf32>
    %210 = tpu.matmul %207, %208, %cst_55 {dimension_numbers = #tpu.dot_dimension_numbers<[1], [1], [0], [0], [0, 0, 1, 0], [], []>} : vector<16x16xf32>, vector<16x16xf32>, vector<16x16xf32> -> vector<16x16xf32>
    %211 = arith.addf %210, %46 : vector<16x16xf32>
    %cst_56 = arith.constant dense<0xFF800000> : vector<16xf32>
    %212 = vector.multi_reduction <maximumf>, %211, %cst_56 [1] : vector<16x16xf32> to vector<16xf32>
    %213 = vector.shape_cast %212 : vector<16xf32> to vector<16x1xf32>
    %214 = vector.broadcast %213 : vector<16x1xf32> to vector<16x16xf32>
    %215 = arith.subf %211, %214 : vector<16x16xf32>
    %216 = math.exp %215 : vector<16x16xf32>
    %cst_57 = arith.constant dense<0.000000e+00> : vector<16xf32>
    %217 = vector.multi_reduction <add>, %216, %cst_57 [1] : vector<16x16xf32> to vector<16xf32>
    %218 = vector.shape_cast %217 : vector<16xf32> to vector<16x1xf32>
    %219 = tpu.reciprocal %218 {approx = true} : vector<16x1xf32> -> vector<16x1xf32>
    %220 = vector.broadcast %219 : vector<16x1xf32> to vector<16x16xf32>
    %221 = arith.mulf %216, %220 : vector<16x16xf32>
    %cst_58 = arith.constant dense<0.000000e+00> : vector<16x16xf32>
    %222 = tpu.matmul %221, %209, %cst_58 {dimension_numbers = #tpu.dot_dimension_numbers<[1], [0], [0], [1], [0, 0, 1, 1], [], []>} : vector<16x16xf32>, vector<16x16xf32>, vector<16x16xf32> -> vector<16x16xf32>
    %223 = vector.extract_strided_slice %173 {offsets = [16, 0], sizes = [16, 32], strides = [1, 1]} : vector<32x32xf32> to vector<16x32xf32>
    %cst_59 = arith.constant dense<0.000000e+00> : vector<16x32xf32>
    %224 = tpu.matmul %222, %223, %cst_59 {dimension_numbers = #tpu.dot_dimension_numbers<[1], [0], [0], [1], [0, 0, 1, 1], [], []>} : vector<16x16xf32>, vector<16x32xf32>, vector<16x32xf32> -> vector<16x32xf32>
    %225 = arith.addf %206, %224 : vector<16x32xf32>
    %226 = arith.addf %169, %225 : vector<16x32xf32>
    %227 = vector.broadcast %177 : vector<1x32xf32> to vector<16x32xf32>
    %228 = arith.addf %226, %227 : vector<16x32xf32>
    %cst_60 = arith.constant dense<0.000000e+00> : vector<16xf32>
    %229 = vector.multi_reduction <add>, %228, %cst_60 [1] : vector<16x32xf32> to vector<16xf32>
    %230 = vector.shape_cast %229 : vector<16xf32> to vector<16x1xf32>
    %cst_61 = arith.constant 3.200000e+01 : f32
    %231 = vector.broadcast %cst_61 : f32 to vector<16x1xf32>
    %232 = arith.divf %230, %231 : vector<16x1xf32>
    %233 = vector.broadcast %232 : vector<16x1xf32> to vector<16x32xf32>
    %234 = arith.subf %228, %233 : vector<16x32xf32>
    %235 = arith.mulf %234, %234 : vector<16x32xf32>
    %cst_62 = arith.constant dense<0.000000e+00> : vector<16xf32>
    %236 = vector.multi_reduction <add>, %235, %cst_62 [1] : vector<16x32xf32> to vector<16xf32>
    %237 = vector.shape_cast %236 : vector<16xf32> to vector<16x1xf32>
    %cst_63 = arith.constant 3.200000e+01 : f32
    %238 = vector.broadcast %cst_63 : f32 to vector<16x1xf32>
    %239 = arith.divf %237, %238 : vector<16x1xf32>
    %240 = vector.broadcast %232 : vector<16x1xf32> to vector<16x32xf32>
    %241 = arith.subf %228, %240 : vector<16x32xf32>
    %cst_64 = arith.constant 9.99999996E-13 : f32
    %242 = vector.broadcast %cst_64 : f32 to vector<16x1xf32>
    %243 = arith.addf %239, %242 : vector<16x1xf32>
    %244 = math.rsqrt %243 : vector<16x1xf32>
    %245 = vector.broadcast %244 : vector<16x1xf32> to vector<16x32xf32>
    %246 = arith.mulf %241, %245 : vector<16x32xf32>
    %247 = vector.broadcast %178 : vector<1x32xf32> to vector<16x32xf32>
    %248 = arith.mulf %246, %247 : vector<16x32xf32>
    %249 = vector.broadcast %179 : vector<1x32xf32> to vector<16x32xf32>
    %250 = arith.addf %248, %249 : vector<16x32xf32>
    %cst_65 = arith.constant dense<0.000000e+00> : vector<16x64xf32>
    %251 = tpu.matmul %250, %174, %cst_65 {dimension_numbers = #tpu.dot_dimension_numbers<[1], [0], [0], [1], [0, 0, 1, 1], [], []>} : vector<16x32xf32>, vector<32x64xf32>, vector<16x64xf32> -> vector<16x64xf32>
    %252 = vector.broadcast %180 : vector<1x64xf32> to vector<16x64xf32>
    %253 = arith.addf %251, %252 : vector<16x64xf32>
    %254 = arith.mulf %253, %253 : vector<16x64xf32>
    %255 = arith.mulf %253, %254 : vector<16x64xf32>
    %cst_66 = arith.constant 4.471500e-02 : f32
    %256 = vector.broadcast %cst_66 : f32 to vector<16x64xf32>
    %257 = arith.mulf %256, %255 : vector<16x64xf32>
    %258 = arith.addf %253, %257 : vector<16x64xf32>
    %cst_67 = arith.constant 0.797884583 : f32
    %259 = vector.broadcast %cst_67 : f32 to vector<16x64xf32>
    %260 = arith.mulf %259, %258 : vector<16x64xf32>
    %261 = math.tanh %260 : vector<16x64xf32>
    %cst_68 = arith.constant 1.000000e+00 : f32
    %262 = vector.broadcast %cst_68 : f32 to vector<16x64xf32>
    %263 = arith.addf %262, %261 : vector<16x64xf32>
    %cst_69 = arith.constant 5.000000e-01 : f32
    %264 = vector.broadcast %cst_69 : f32 to vector<16x64xf32>
    %265 = arith.mulf %264, %263 : vector<16x64xf32>
    %266 = arith.mulf %253, %265 : vector<16x64xf32>
    %cst_70 = arith.constant dense<0.000000e+00> : vector<16x32xf32>
    %267 = tpu.matmul %266, %175, %cst_70 {dimension_numbers = #tpu.dot_dimension_numbers<[1], [0], [0], [1], [0, 0, 1, 1], [], []>} : vector<16x64xf32>, vector<64x32xf32>, vector<16x32xf32> -> vector<16x32xf32>
    %268 = vector.broadcast %181 : vector<1x32xf32> to vector<16x32xf32>
    %269 = arith.addf %267, %268 : vector<16x32xf32>
    %270 = arith.addf %250, %269 : vector<16x32xf32>
    %cst_71 = arith.constant dense<0.000000e+00> : vector<16xf32>
    %271 = vector.multi_reduction <add>, %270, %cst_71 [1] : vector<16x32xf32> to vector<16xf32>
    %272 = vector.shape_cast %271 : vector<16xf32> to vector<16x1xf32>
    %cst_72 = arith.constant 3.200000e+01 : f32
    %273 = vector.broadcast %cst_72 : f32 to vector<16x1xf32>
    %274 = arith.divf %272, %273 : vector<16x1xf32>
    %275 = vector.broadcast %274 : vector<16x1xf32> to vector<16x32xf32>
    %276 = arith.subf %270, %275 : vector<16x32xf32>
    %277 = arith.mulf %276, %276 : vector<16x32xf32>
    %cst_73 = arith.constant dense<0.000000e+00> : vector<16xf32>
    %278 = vector.multi_reduction <add>, %277, %cst_73 [1] : vector<16x32xf32> to vector<16xf32>
    %279 = vector.shape_cast %278 : vector<16xf32> to vector<16x1xf32>
    %cst_74 = arith.constant 3.200000e+01 : f32
    %280 = vector.broadcast %cst_74 : f32 to vector<16x1xf32>
    %281 = arith.divf %279, %280 : vector<16x1xf32>
    %282 = vector.broadcast %274 : vector<16x1xf32> to vector<16x32xf32>
    %283 = arith.subf %270, %282 : vector<16x32xf32>
    %cst_75 = arith.constant 9.99999996E-13 : f32
    %284 = vector.broadcast %cst_75 : f32 to vector<16x1xf32>
    %285 = arith.addf %281, %284 : vector<16x1xf32>
    %286 = math.rsqrt %285 : vector<16x1xf32>
    %287 = vector.broadcast %286 : vector<16x1xf32> to vector<16x32xf32>
    %288 = arith.mulf %283, %287 : vector<16x32xf32>
    %289 = vector.broadcast %182 : vector<1x32xf32> to vector<16x32xf32>
    %290 = arith.mulf %288, %289 : vector<16x32xf32>
    %291 = vector.broadcast %183 : vector<1x32xf32> to vector<16x32xf32>
    %292 = arith.addf %290, %291 : vector<16x32xf32>
    %293 = tpu.iota {dimensions = array<i32: 0>} : vector<8x16xi32>
    %294 = tpu.iota {dimensions = array<i32: 1>} : vector<8x16xi32>
    %c8_i32 = arith.constant 8 : i32
    %295 = vector.broadcast %c8_i32 : i32 to vector<8x16xi32>
    %296 = arith.muli %293, %295 : vector<8x16xi32>
    %297 = arith.cmpi eq, %294, %296 : vector<8x16xi32>
    %298 = arith.extui %297 : vector<8x16xi1> to vector<8x16xi32>
    %299 = arith.sitofp %298 : vector<8x16xi32> to vector<8x16xf32>
    %cst_76 = arith.constant dense<0.000000e+00> : vector<8x32xf32>
    %300 = tpu.matmul %299, %292, %cst_76 {dimension_numbers = #tpu.dot_dimension_numbers<[1], [0], [0], [1], [0, 0, 1, 1], [], []>} : vector<8x16xf32>, vector<16x32xf32>, vector<8x32xf32> -> vector<8x32xf32>
    %301 = vector.extract_strided_slice %0 {offsets = [0, 0], sizes = [32, 128], strides = [1, 1]} : vector<40x128xf32> to vector<32x128xf32>
    %cst_77 = arith.constant dense<0.000000e+00> : vector<8x128xf32>
    %302 = tpu.matmul %300, %301, %cst_77 {dimension_numbers = #tpu.dot_dimension_numbers<[1], [0], [0], [1], [0, 0, 1, 1], [], []>} : vector<8x32xf32>, vector<32x128xf32>, vector<8x128xf32> -> vector<8x128xf32>
    %303 = vector.extract_strided_slice %0 {offsets = [34, 0], sizes = [1, 128], strides = [1, 1]} : vector<40x128xf32> to vector<1x128xf32>
    %304 = vector.broadcast %303 : vector<1x128xf32> to vector<8x128xf32>
    %305 = arith.addf %302, %304 : vector<8x128xf32>
    %c0_78 = arith.constant 0 : index
    %c0_79 = arith.constant 0 : index
    %306 = vector.load %arg4[%c0_78, %c0_79] : memref<8x128xf32, #tpu.memory_space<vmem>>, vector<8x128xf32>
    tpu.vector_store %arg4[%c0_78, %c0_79], %305 {strides = array<i32>} : memref<8x128xf32, #tpu.memory_space<vmem>>, vector<8x128xf32>,
    return
  }
}

</mosaic_0001>

<llo_original>
// kernel: liberty_predictor_forward.1
$region0: #{liberty_predictor_forward.1}
  #allocation0 [shape = 'u32[]', space=smem, size = 0x4, offset = 0x4, fixed_abs, tag = 'smem constant byte address 0x4 - core index']
  #allocation1 [shape = 'u32[144,128]{1,0:T(1,128)}', space=vmem, size = 0x12000, scoped, tag = 'internal scratch']
  %s0 = inlined_call_operand.vmem [shape: f32[16,32], index: 0, kind: input, shape index: {}]
  %s1 = inlined_call_operand.vmem [shape: f32[1,16], index: 1, kind: input, shape index: {}]
  %s2 = inlined_call_operand.vmem [shape: f32[40,128], index: 2, kind: input, shape index: {}]
  %s3 = inlined_call_operand.vmem [shape: f32[2,168,128], index: 3, kind: input, shape index: {}]
  %s4 = inlined_call_operand.vmem [shape: f32[8,128], index: 4, kind: output, shape index: {}]
  %s5 = sld [smem:[#allocation0]]
  $region26: #{liberty_predictor_forward.1} parent=0
    _
  %s7 = ssub.s32 1, %s5
  %s8 = scalar_select 0, %s7, %s5
  // Predicated region
  $region2: #{liberty_predictor_forward.1} parent=0 // pred_check
    _
  $region3: #{liberty_predictor_forward.1} parent=0 // pred_check_branch
    %10 = sbr.rel (0) target = $region5
  $region4: #{liberty_predictor_forward.1} parent=0 // pred_region
    _
  $region5: #{liberty_predictor_forward.1} parent=0 // pred_fallthru
    _
  // Predicated region
  $region6: #{liberty_predictor_forward.1} parent=0 // pred_check
    _
  $region7: #{liberty_predictor_forward.1} parent=0 // pred_check_branch
    %12 = sbr.rel (0) target = $region9
  $region8: #{liberty_predictor_forward.1} parent=0 // pred_region
    _
  $region9: #{liberty_predictor_forward.1} parent=0 // pred_fallthru
    _
  // Predicated region
  $region10: #{liberty_predictor_forward.1} parent=0 // pred_check
    _
  $region11: #{liberty_predictor_forward.1} parent=0 // pred_check_branch
    %14 = sbr.rel (0) target = $region13
  $region12: #{liberty_predictor_forward.1} parent=0 // pred_region
    _
  $region13: #{liberty_predictor_forward.1} parent=0 // pred_fallthru
    _
  // Predicated region
  $region14: #{liberty_predictor_forward.1} parent=0 // pred_check
    _
  $region15: #{liberty_predictor_forward.1} parent=0 // pred_check_branch
    %16 = sbr.rel (0) target = $region17
  $region16: #{liberty_predictor_forward.1} parent=0 // pred_region
    _
  $region17: #{liberty_predictor_forward.1} parent=0 // pred_fallthru
    _
  %v17 = vld [vmem:[%s2] sm:$0xff]
  %v18 = vld [vmem:[%s2 + $0x8] sm:$0xff]
  %v19 = vld [vmem:[%s2 + $0x10] sm:$0xff]
  %v20 = vld [vmem:[%s2 + $0x18] sm:$0xff]
  %v21 = vld [vmem:[%s2 + $0x20] sm:$0xff]
  %v22 = vld [vmem:[%s0] sm:$0xff]
  %v23 = vld [vmem:[%s0 + $0x8] sm:$0xff]
  %vm24 = vcmask 261120
  %v25 = vsel %vm24, %v22, 0.0
  %26 = vadd.xlane.f32.xlu0 %v25
  %v27 = vpop.xlane.xlu0 %26
  %v28 = vsel %vm24, %v23, 0.0
  %29 = vadd.xlane.f32.xlu0 %v28
  %v30 = vpop.xlane.xlu0 %29
  %v31 = vrcp.pop 32.0
  %v32 = vmul.f32 %v27, %v31
  %v33 = vmul.f32 %v30, %v31
  %v34 = vsub.f32 %v22, %v32
  %v35 = vsub.f32 %v23, %v33
  %v36 = vmul.f32 %v34, %v34
  %v37 = vmul.f32 %v35, %v35
  %v38 = vsel %vm24, %v36, 0.0
  %39 = vadd.xlane.f32.xlu0 %v38
  %v40 = vpop.xlane.xlu0 %39
  %v41 = vsel %vm24, %v37, 0.0
  %42 = vadd.xlane.f32.xlu0 %v41
  %v43 = vpop.xlane.xlu0 %42
  %v44 = vmul.f32 %v40, %v31
  %v45 = vmul.f32 %v43, %v31
  %v46 = vadd.f32 %v44, 1e-12
  %v47 = vadd.f32 %v45, 1e-12
  %v48 = vrsqrt.pop %v46
  %v49 = vrsqrt.pop %v47
  %v50 = vmul.f32 %v34, %v48
  %v51 = vmul.f32 %v35, %v49
  %v52 = vlaneseq
  %v53 = vshrl.u32 %v52, 7
  %v54 = vsub.s32 0, %v53
  %v55 = vrot.slane %v21, %v54
  %v56 = vmul.f32 %v50, %v55
  %v57 = vmul.f32 %v51, %v55
  %v58 = vlaneseq
  %v59 = vshrl.u32 %v58, 7
  %v60 = vsub.s32 1, %v59
  %v61 = vrot.slane %v21, %v60
  %v62 = vadd.f32 %v56, %v61
  %v63 = vadd.f32 %v57, %v61
  %v64 = vlaneseq
  %v65 = vshrl.u32 %v64, 7
  %v66 = vadd.s32 %v65, 8
  %v67 = vcvt.s32.f32 %v65
  %v68 = vcvt.s32.f32 %v66
  %v69 = vlaneseq
  %v70 = vand.u32 %v69, 127
  %v71 = vcvt.s32.f32 %v70
  %v72 = vadd.f32 %v67, 0.5
  %v73 = vadd.f32 %v68, 0.5
  %v74 = vmul.f32 %v72, 0.125
  %v75 = vmul.f32 %v73, 0.125
  %v76 = vfloor.f32 %v74
  %v77 = vfloor.f32 %v75
  %v78 = vadd.f32 %v71, 0.5
  %v79 = vmul.f32 %v78, 0.125
  %v80 = vfloor.f32 %v79
  %vm81 = vcmp.eq.f32.partialorder %v76, %v80
  %vm82 = vcmp.eq.f32.partialorder %v77, %v80
  %v83 = vsel %vm81, 0.0, -1e+09
  %v84 = vsel %vm82, 0.0, -1e+09
  %v85 = vld [vmem:[%s1] sm:$0x1]
  %v87 = vlaneseq
  %v88 = vshrl.u32 %v87, 7
  %v89 = vsub.s32 0, %v88
  %v90 = vrot.slane %v85, %v89
  %v92 = vadd.f32 %v83, %v90
  %v93 = vadd.f32 %v84, %v90
  %v94 = vld [vmem:[%s3] sm:$0xff]
  %v95 = vld [vmem:[%s3 + $0x8] sm:$0xff]
  %v96 = vld [vmem:[%s3 + $0x10] sm:$0xff]
  %v97 = vld [vmem:[%s3 + $0x18] sm:$0xff]
  %v98 = vld [vmem:[%s3 + $0x20] sm:$0xff]
  %v99 = vld [vmem:[%s3 + $0x28] sm:$0xff]
  %v100 = vld [vmem:[%s3 + $0x30] sm:$0xff]
  %v101 = vld [vmem:[%s3 + $0x38] sm:$0xff]
  %v102 = vld [vmem:[%s3 + $0x40] sm:$0xff]
  %v103 = vld [vmem:[%s3 + $0x48] sm:$0xff]
  %v104 = vld [vmem:[%s3 + $0x50] sm:$0xff]
  %v105 = vld [vmem:[%s3 + $0x58] sm:$0xff]
  %v106 = vld [vmem:[%s3 + $0x60] sm:$0xff]
  %v107 = vld [vmem:[%s3 + $0x68] sm:$0xff]
  %v108 = vld [vmem:[%s3 + $0x70] sm:$0xff]
  %v109 = vld [vmem:[%s3 + $0x78] sm:$0xff]
  %v110 = vld [vmem:[%s3 + $0x80] sm:$0xff]
  %v111 = vld [vmem:[%s3 + $0x88] sm:$0xff]
  %v112 = vld [vmem:[%s3 + $0x90] sm:$0xff]
  %v113 = vld [vmem:[%s3 + $0x98] sm:$0xff]
  %v114 = vld [vmem:[%s3 + $0xa0] sm:$0xff]
  %v115 = vlaneseq
  %v116 = vshrl.u32 %v115, 7
  %v117 = vsub.s32 0, %v116
  %v118 = vrot.slane %v114, %v117
  %v120 = vsel %vm24, %v62, 0
  %v123 = vsel %vm24, %v63, 0
  %125 = vmatprep.subr.mxu0 0.0
  %126 = vmatpush1.msra.mxu0 %v94
  %127 = vmatprep.subr.mxu0 0.0
  %128 = vmatpush1.msra.mxu0 %v95
  %129 = vmatprep.subr.mxu0 0.0
  %130 = vmatpush1.msra.mxu0 %v96
  %131 = vmatprep.subr.mxu0 0.0
  %132 = vmatpush1.msra.mxu0 %v97
  %133 = vmatprep.subr.mxu0 0.0
  %134 = vmatpush1.msra.mxu0 0.0
  %135 = vmatprep.subr.mxu0 0.0
  %136 = vmatpush1.msra.mxu0 0.0
  %137 = vmatprep.subr.mxu0 0.0
  %138 = vmatpush1.msra.mxu0 0.0
  %139 = vmatprep.subr.mxu0 0.0
  %140 = vmatpush1.msra.mxu0 0.0
  %141 = vmatprep.subr.mxu0 0.0
  %142 = vmatpush1.msra.mxu0 0.0
  %143 = vmatprep.subr.mxu0 0.0
  %144 = vmatpush1.msra.mxu0 0.0
  %145 = vmatprep.subr.mxu0 0.0
  %146 = vmatpush1.msra.mxu0 0.0
  %147 = vmatprep.subr.mxu0 0.0
  %148 = vmatpush1.msra.mxu0 0.0
  %149 = vmatprep.subr.mxu0 0.0
  %150 = vmatpush1.msra.mxu0 0.0
  %151 = vmatprep.subr.mxu0 0.0
  %152 = vmatpush1.msra.mxu0 0.0
  %153 = vmatprep.subr.mxu0 0.0
  %154 = vmatpush1.msra.mxu0 0.0
  %155 = vmatprep.subr.mxu0 0.0
  %156 = vmatpush1.msra.mxu0 0.0
  %157 = vmatprep.subr.mxu0 0.0
  %158 = vmatpush1.msra.mxu0 0.0
  %159 = vmatprep.subr.mxu0 0.0
  %160 = vmatpush1.msra.mxu0 0.0
  %161 = vmatprep.subr.mxu0 0.0
  %162 = vmatpush1.msra.mxu0 0.0
  %163 = vmatprep.subr.mxu0 0.0
  %164 = vmatpush1.msra.mxu0 0.0
  %165 = vmatprep.subr.mxu0 0.0
  %166 = vmatpush1.msra.mxu0 0.0
  %167 = vmatprep.subr.mxu0 0.0
  %168 = vmatpush1.msra.mxu0 0.0
  %169 = vmatprep.subr.mxu0 0.0
  %170 = vmatpush1.msra.mxu0 0.0
  %171 = vmatprep.subr.mxu0 0.0
  %172 = vmatpush1.msra.mxu0 0.0
  %173 = vmatprep.subr.mxu0 0.0
  %174 = vmatpush1.msra.mxu0 0.0
  %175 = vmatprep.subr.mxu0 0.0
  %176 = vmatpush1.msra.mxu0 0.0
  %177 = vmatprep.subr.mxu0 0.0
  %178 = vmatpush1.msra.mxu0 0.0
  %179 = vmatprep.subr.mxu0 0.0
  %180 = vmatpush1.msra.mxu0 0.0
  %181 = vmatprep.subr.mxu0 0.0
  %182 = vmatpush1.msra.mxu0 0.0
  %183 = vmatprep.subr.mxu0 0.0
  %184 = vmatpush1.msra.mxu0 0.0
  %185 = vmatprep.subr.mxu0 0.0
  %186 = vmatpush1.msra.mxu0 0.0
  %187 = vmatprep.subr.mxu0 0.0
  %188 = vmatpush1.msra.mxu0 0.0
  %189 = vmatprep.mubr.f32.mxu0 0.0
  %190 = vmatmul.mubr.f32.gmra.mrb[0].mxu0 %v120
  %v191 = vpop.f32.mrb[0].mxu0
  %v192 = vadd.f32 %v118, %v191
  %v193 = vpop.f32.mrb[0].mxu0
  %194 = vmatprep.mubr.f32.mxu0 0.0
  %195 = vmatmul.mubr.f32.gmra.mrb[0].mxu0 %v123
  %v196 = vpop.f32.mrb[0].mxu0
  %v197 = vadd.f32 %v118, %v196
  %v198 = vpop.f32.mrb[0].mxu0
  %199 = vdwg.mxu0
  %202 = vrot.lane.b32.xlu0 %v192, 96
  %v203 = vpop.permute.xlu0 %202
  %204 = vrot.lane.b32.xlu0 %v197, 96
  %v205 = vpop.permute.xlu0 %204
  %vm206 = vcmask 130048
  %v207 = vsel %vm206, %v192, 0
  %v209 = vsel %vm206, %v197, 0
  %v211 = vsel %vm206, %v203, 0
  %v213 = vsel %vm206, %v205, 0
  %215 = vmatprep.subr.mxu0 0.0
  %216 = vmatpush1.xpose.msra.mxu0 %v211
  %217 = vmatprep.subr.mxu0 0.0
  %218 = vmatpush1.xpose.msra.mxu0 %v213
  %219 = vmatprep.subr.mxu0 0.0
  %220 = vmatpush1.xpose.msra.mxu0 0.0
  %221 = vmatprep.subr.mxu0 0.0
  %222 = vmatpush1.xpose.msra.mxu0 0.0
  %223 = vmatprep.subr.mxu0 0.0
  %224 = vmatpush1.xpose.msra.mxu0 0.0
  %225 = vmatprep.subr.mxu0 0.0
  %226 = vmatpush1.xpose.msra.mxu0 0.0
  %227 = vmatprep.subr.mxu0 0.0
  %228 = vmatpush1.xpose.msra.mxu0 0.0
  %229 = vmatprep.subr.mxu0 0.0
  %230 = vmatpush1.xpose.msra.mxu0 0.0
  %231 = vmatprep.subr.mxu0 0.0
  %232 = vmatpush1.xpose.msra.mxu0 0.0
  %233 = vmatprep.subr.mxu0 0.0
  %234 = vmatpush1.xpose.msra.mxu0 0.0
  %235 = vmatprep.subr.mxu0 0.0
  %236 = vmatpush1.xpose.msra.mxu0 0.0
  %237 = vmatprep.subr.mxu0 0.0
  %238 = vmatpush1.xpose.msra.mxu0 0.0
  %239 = vmatprep.subr.mxu0 0.0
  %240 = vmatpush1.xpose.msra.mxu0 0.0
  %241 = vmatprep.subr.mxu0 0.0
  %242 = vmatpush1.xpose.msra.mxu0 0.0
  %243 = vmatprep.subr.mxu0 0.0
  %244 = vmatpush1.xpose.msra.mxu0 0.0
  %245 = vmatprep.subr.mxu0 0.0
  %246 = vmatpush1.xpose.msra.mxu0 0.0
  %247 = vmatprep.subr.mxu0 0.0
  %248 = vmatpush1.xpose.msra.mxu0 0.0
  %249 = vmatprep.subr.mxu0 0.0
  %250 = vmatpush1.xpose.msra.mxu0 0.0
  %251 = vmatprep.subr.mxu0 0.0
  %252 = vmatpush1.xpose.msra.mxu0 0.0
  %253 = vmatprep.subr.mxu0 0.0
  %254 = vmatpush1.xpose.msra.mxu0 0.0
  %255 = vmatprep.subr.mxu0 0.0
  %256 = vmatpush1.xpose.msra.mxu0 0.0
  %257 = vmatprep.subr.mxu0 0.0
  %258 = vmatpush1.xpose.msra.mxu0 0.0
  %259 = vmatprep.subr.mxu0 0.0
  %260 = vmatpush1.xpose.msra.mxu0 0.0
  %261 = vmatprep.subr.mxu0 0.0
  %262 = vmatpush1.xpose.msra.mxu0 0.0
  %263 = vmatprep.subr.mxu0 0.0
  %264 = vmatpush1.xpose.msra.mxu0 0.0
  %265 = vmatprep.subr.mxu0 0.0
  %266 = vmatpush1.xpose.msra.mxu0 0.0
  %267 = vmatprep.subr.mxu0 0.0
  %268 = vmatpush1.xpose.msra.mxu0 0.0
  %269 = vmatprep.subr.mxu0 0.0
  %270 = vmatpush1.xpose.msra.mxu0 0.0
  %271 = vmatprep.subr.mxu0 0.0
  %272 = vmatpush1.xpose.msra.mxu0 0.0
  %273 = vmatprep.subr.mxu0 0.0
  %274 = vmatpush1.xpose.msra.mxu0 0.0
  %275 = vmatprep.subr.mxu0 0.0
  %276 = vmatpush1.xpose.msra.mxu0 0.0
  %277 = vmatprep.subr.mxu0 0.0
  %278 = vmatpush1.xpose.msra.mxu0 0.0
  %279 = vmatprep.mubr.f32.mxu0 0.0
  %280 = vmatmul.mubr.f32.gmra.mrb[0].mxu0 %v207
  %v281 = vpop.f32.mrb[0].mxu0
  %v282 = vadd.f32 %v92, %v281
  %v283 = vpop.f32.mrb[0].mxu0
  %284 = vmatprep.mubr.f32.mxu0 0.0
  %285 = vmatmul.mubr.f32.gmra.mrb[0].mxu0 %v209
  %v286 = vpop.f32.mrb[0].mxu0
  %v287 = vadd.f32 %v93, %v286
  %v288 = vpop.f32.mrb[0].mxu0
  %289 = vdwg.mxu0
  %v290 = vsel %vm206, %v282, -inf
  %291 = vmax.xlane.f32.xlu0 %v290
  %v292 = vpop.xlane.xlu0 %291
  %v293 = vsel %vm206, %v287, -inf
  %294 = vmax.xlane.f32.xlu0 %v293
  %v295 = vpop.xlane.xlu0 %294
  %v296 = vsub.f32 %v282, %v292
  %v297 = vsub.f32 %v287, %v295
  %v298 = vmul.f32 %v296, 1.442695
  %v299 = vpow.pop %v298
  %v300 = vmul.f32 %v297, 1.442695
  %v301 = vpow.pop %v300
  %v302 = vsel %vm206, %v299, 0.0
  %303 = vadd.xlane.f32.xlu0 %v302
  %v304 = vpop.xlane.xlu0 %303
  %v305 = vsel %vm206, %v301, 0.0
  %306 = vadd.xlane.f32.xlu0 %v305
  %v307 = vpop.xlane.xlu0 %306
  %v308 = vrcp.pop %v304
  %v309 = vrcp.pop %v307
  %v310 = vmul.f32 %v299, %v308
  %v311 = vmul.f32 %v301, %v309
  %312 = vrot.lane.b32.xlu0 %v192, 64
  %v313 = vpop.permute.xlu0 %312
  %314 = vrot.lane.b32.xlu0 %v197, 64
  %v315 = vpop.permute.xlu0 %314
  %v319 = vsel %vm206, %v310, 0
  %v322 = vsel %vm206, %v311, 0
  %324 = vmatprep.subr.mxu0 0.0
  %325 = vmatpush1.msra.mxu0 %v313
  %326 = vmatprep.subr.mxu0 0.0
  %327 = vmatpush1.msra.mxu0 %v315
  %328 = vmatprep.subr.mxu0 0.0
  %329 = vmatpush1.msra.mxu0 0.0
  %330 = vmatprep.subr.mxu0 0.0
  %331 = vmatpush1.msra.mxu0 0.0
  %332 = vmatprep.subr.mxu0 0.0
  %333 = vmatpush1.msra.mxu0 0.0
  %334 = vmatprep.subr.mxu0 0.0
  %335 = vmatpush1.msra.mxu0 0.0
  %336 = vmatprep.subr.mxu0 0.0
  %337 = vmatpush1.msra.mxu0 0.0
  %338 = vmatprep.subr.mxu0 0.0
  %339 = vmatpush1.msra.mxu0 0.0
  %340 = vmatprep.subr.mxu0 0.0
  %341 = vmatpush1.msra.mxu0 0.0
  %342 = vmatprep.subr.mxu0 0.0
  %343 = vmatpush1.msra.mxu0 0.0
  %344 = vmatprep.subr.mxu0 0.0
  %345 = vmatpush1.msra.mxu0 0.0
  %346 = vmatprep.subr.mxu0 0.0
  %347 = vmatpush1.msra.mxu0 0.0
  %348 = vmatprep.subr.mxu0 0.0
  %349 = vmatpush1.msra.mxu0 0.0
  %350 = vmatprep.subr.mxu0 0.0
  %351 = vmatpush1.msra.mxu0 0.0
  %352 = vmatprep.subr.mxu0 0.0
  %353 = vmatpush1.msra.mxu0 0.0
  %354 = vmatprep.subr.mxu0 0.0
  %355 = vmatpush1.msra.mxu0 0.0
  %356 = vmatprep.subr.mxu0 0.0
  %357 = vmatpush1.msra.mxu0 0.0
  %358 = vmatprep.subr.mxu0 0.0
  %359 = vmatpush1.msra.mxu0 0.0
  %360 = vmatprep.subr.mxu0 0.0
  %361 = vmatpush1.msra.mxu0 0.0
  %362 = vmatprep.subr.mxu0 0.0
  %363 = vmatpush1.msra.mxu0 0.0
  %364 = vmatprep.subr.mxu0 0.0
  %365 = vmatpush1.msra.mxu0 0.0
  %366 = vmatprep.subr.mxu0 0.0
  %367 = vmatpush1.msra.mxu0 0.0
  %368 = vmatprep.subr.mxu0 0.0
  %369 = vmatpush1.msra.mxu0 0.0
  %370 = vmatprep.subr.mxu0 0.0
  %371 = vmatpush1.msra.mxu0 0.0
  %372 = vmatprep.subr.mxu0 0.0
  %373 = vmatpush1.msra.mxu0 0.0
  %374 = vmatprep.subr.mxu0 0.0
  %375 = vmatpush1.msra.mxu0 0.0
  %376 = vmatprep.subr.mxu0 0.0
  %377 = vmatpush1.msra.mxu0 0.0
  %378 = vmatprep.subr.mxu0 0.0
  %379 = vmatpush1.msra.mxu0 0.0
  %380 = vmatprep.subr.mxu0 0.0
  %381 = vmatpush1.msra.mxu0 0.0
  %382 = vmatprep.subr.mxu0 0.0
  %383 = vmatpush1.msra.mxu0 0.0
  %384 = vmatprep.subr.mxu0 0.0
  %385 = vmatpush1.msra.mxu0 0.0
  %386 = vmatprep.subr.mxu0 0.0
  %387 = vmatpush1.msra.mxu0 0.0
  %388 = vmatprep.mubr.f32.mxu0 0.0
  %389 = vmatmul.mubr.f32.gmra.mrb[0].mxu0 %v319
  %v390 = vpop.f32.mrb[0].mxu0
  %v391 = vadd.f32 0.0, %v390
  %v392 = vpop.f32.mrb[0].mxu0
  %393 = vmatprep.mubr.f32.mxu0 0.0
  %394 = vmatmul.mubr.f32.gmra.mrb[0].mxu0 %v322
  %v395 = vpop.f32.mrb[0].mxu0
  %v396 = vadd.f32 0.0, %v395
  %v397 = vpop.f32.mrb[0].mxu0
  %398 = vdwg.mxu0
  %399 = vrot.lane.b32.xlu0 %v192, 112
  %v400 = vpop.permute.xlu0 %399
  %401 = vrot.lane.b32.xlu0 %v197, 112
  %v402 = vpop.permute.xlu0 %401
  %403 = vrot.lane.b32.xlu0 %v192, 80
  %v404 = vpop.permute.xlu0 %403
  %405 = vrot.lane.b32.xlu0 %v197, 80
  %v406 = vpop.permute.xlu0 %405
  %v407 = vsel %vm206, %v400, 0
  %v409 = vsel %vm206, %v402, 0
  %v411 = vsel %vm206, %v404, 0
  %v413 = vsel %vm206, %v406, 0
  %415 = vmatprep.subr.mxu0 0.0
  %416 = vmatpush1.xpose.msra.mxu0 %v411
  %417 = vmatprep.subr.mxu0 0.0
  %418 = vmatpush1.xpose.msra.mxu0 %v413
  %419 = vmatprep.subr.mxu0 0.0
  %420 = vmatpush1.xpose.msra.mxu0 0.0
  %421 = vmatprep.subr.mxu0 0.0
  %422 = vmatpush1.xpose.msra.mxu0 0.0
  %423 = vmatprep.subr.mxu0 0.0
  %424 = vmatpush1.xpose.msra.mxu0 0.0
  %425 = vmatprep.subr.mxu0 0.0
  %426 = vmatpush1.xpose.msra.mxu0 0.0
  %427 = vmatprep.subr.mxu0 0.0
  %428 = vmatpush1.xpose.msra.mxu0 0.0
  %429 = vmatprep.subr.mxu0 0.0
  %430 = vmatpush1.xpose.msra.mxu0 0.0
  %431 = vmatprep.subr.mxu0 0.0
  %432 = vmatpush1.xpose.msra.mxu0 0.0
  %433 = vmatprep.subr.mxu0 0.0
  %434 = vmatpush1.xpose.msra.mxu0 0.0
  %435 = vmatprep.subr.mxu0 0.0
  %436 = vmatpush1.xpose.msra.mxu0 0.0
  %437 = vmatprep.subr.mxu0 0.0
  %438 = vmatpush1.xpose.msra.mxu0 0.0
  %439 = vmatprep.subr.mxu0 0.0
  %440 = vmatpush1.xpose.msra.mxu0 0.0
  %441 = vmatprep.subr.mxu0 0.0
  %442 = vmatpush1.xpose.msra.mxu0 0.0
  %443 = vmatprep.subr.mxu0 0.0
  %444 = vmatpush1.xpose.msra.mxu0 0.0
  %445 = vmatprep.subr.mxu0 0.0
  %446 = vmatpush1.xpose.msra.mxu0 0.0
  %447 = vmatprep.subr.mxu0 0.0
  %448 = vmatpush1.xpose.msra.mxu0 0.0
  %449 = vmatprep.subr.mxu0 0.0
  %450 = vmatpush1.xpose.msra.mxu0 0.0
  %451 = vmatprep.subr.mxu0 0.0
  %452 = vmatpush1.xpose.msra.mxu0 0.0
  %453 = vmatprep.subr.mxu0 0.0
  %454 = vmatpush1.xpose.msra.mxu0 0.0
  %455 = vmatprep.subr.mxu0 0.0
  %456 = vmatpush1.xpose.msra.mxu0 0.0
  %457 = vmatprep.subr.mxu0 0.0
  %458 = vmatpush1.xpose.msra.mxu0 0.0
  %459 = vmatprep.subr.mxu0 0.0
  %460 = vmatpush1.xpose.msra.mxu0 0.0
  %461 = vmatprep.subr.mxu0 0.0
  %462 = vmatpush1.xpose.msra.mxu0 0.0
  %463 = vmatprep.subr.mxu0 0.0
  %464 = vmatpush1.xpose.msra.mxu0 0.0
  %465 = vmatprep.subr.mxu0 0.0
  %466 = vmatpush1.xpose.msra.mxu0 0.0
  %467 = vmatprep.subr.mxu0 0.0
  %468 = vmatpush1.xpose.msra.mxu0 0.0
  %469 = vmatprep.subr.mxu0 0.0
  %470 = vmatpush1.xpose.msra.mxu0 0.0
  %471 = vmatprep.subr.mxu0 0.0
  %472 = vmatpush1.xpose.msra.mxu0 0.0
  %473 = vmatprep.subr.mxu0 0.0
  %474 = vmatpush1.xpose.msra.mxu0 0.0
  %475 = vmatprep.subr.mxu0 0.0
  %476 = vmatpush1.xpose.msra.mxu0 0.0
  %477 = vmatprep.subr.mxu0 0.0
  %478 = vmatpush1.xpose.msra.mxu0 0.0
  %479 = vmatprep.mubr.f32.mxu0 0.0
  %480 = vmatmul.mubr.f32.gmra.mrb[0].mxu0 %v407
  %v481 = vpop.f32.mrb[0].mxu0
  %v482 = vadd.f32 %v92, %v481
  %v483 = vpop.f32.mrb[0].mxu0
  %484 = vmatprep.mubr.f32.mxu0 0.0
  %485 = vmatmul.mubr.f32.gmra.mrb[0].mxu0 %v409
  %v486 = vpop.f32.mrb[0].mxu0
  %v487 = vadd.f32 %v93, %v486
  %v488 = vpop.f32.mrb[0].mxu0
  %489 = vdwg.mxu0
  %v490 = vsel %vm206, %v482, -inf
  %491 = vmax.xlane.f32.xlu0 %v490
  %v492 = vpop.xlane.xlu0 %491
  %v493 = vsel %vm206, %v487, -inf
  %494 = vmax.xlane.f32.xlu0 %v493
  %v495 = vpop.xlane.xlu0 %494
  %v496 = vsub.f32 %v482, %v492
  %v497 = vsub.f32 %v487, %v495
  %v498 = vmul.f32 %v496, 1.442695
  %v499 = vpow.pop %v498
  %v500 = vmul.f32 %v497, 1.442695
  %v501 = vpow.pop %v500
  %v502 = vsel %vm206, %v499, 0.0
  %503 = vadd.xlane.f32.xlu0 %v502
  %v504 = vpop.xlane.xlu0 %503
  %v505 = vsel %vm206, %v501, 0.0
  %506 = vadd.xlane.f32.xlu0 %v505
  %v507 = vpop.xlane.xlu0 %506
  %v508 = vrcp.pop %v504
  %v509 = vrcp.pop %v507
  %v510 = vmul.f32 %v499, %v508
  %v511 = vmul.f32 %v501, %v509
  %512 = vrot.lane.b32.xlu0 %v192, 48
  %v513 = vpop.permute.xlu0 %512
  %514 = vrot.lane.b32.xlu0 %v197, 48
  %v515 = vpop.permute.xlu0 %514
  %v519 = vsel %vm206, %v510, 0
  %v522 = vsel %vm206, %v511, 0
  %524 = vmatprep.subr.mxu0 0.0
  %525 = vmatpush1.msra.mxu0 %v513
  %526 = vmatprep.subr.mxu0 0.0
  %527 = vmatpush1.msra.mxu0 %v515
  %528 = vmatprep.subr.mxu0 0.0
  %529 = vmatpush1.msra.mxu0 0.0
  %530 = vmatprep.subr.mxu0 0.0
  %531 = vmatpush1.msra.mxu0 0.0
  %532 = vmatprep.subr.mxu0 0.0
  %533 = vmatpush1.msra.mxu0 0.0
  %534 = vmatprep.subr.mxu0 0.0
  %535 = vmatpush1.msra.mxu0 0.0
  %536 = vmatprep.subr.mxu0 0.0
  %537 = vmatpush1.msra.mxu0 0.0
  %538 = vmatprep.subr.mxu0 0.0
  %539 = vmatpush1.msra.mxu0 0.0
  %540 = vmatprep.subr.mxu0 0.0
  %541 = vmatpush1.msra.mxu0 0.0
  %542 = vmatprep.subr.mxu0 0.0
  %543 = vmatpush1.msra.mxu0 0.0
  %544 = vmatprep.subr.mxu0 0.0
  %545 = vmatpush1.msra.mxu0 0.0
  %546 = vmatprep.subr.mxu0 0.0
  %547 = vmatpush1.msra.mxu0 0.0
  %548 = vmatprep.subr.mxu0 0.0
  %549 = vmatpush1.msra.mxu0 0.0
  %550 = vmatprep.subr.mxu0 0.0
  %551 = vmatpush1.msra.mxu0 0.0
  %552 = vmatprep.subr.mxu0 0.0
  %553 = vmatpush1.msra.mxu0 0.0
  %554 = vmatprep.subr.mxu0 0.0
  %555 = vmatpush1.msra.mxu0 0.0
  %556 = vmatprep.subr.mxu0 0.0
  %557 = vmatpush1.msra.mxu0 0.0
  %558 = vmatprep.subr.mxu0 0.0
  %559 = vmatpush1.msra.mxu0 0.0
  %560 = vmatprep.subr.mxu0 0.0
  %561 = vmatpush1.msra.mxu0 0.0
  %562 = vmatprep.subr.mxu0 0.0
  %563 = vmatpush1.msra.mxu0 0.0
  %564 = vmatprep.subr.mxu0 0.0
  %565 = vmatpush1.msra.mxu0 0.0
  %566 = vmatprep.subr.mxu0 0.0
  %567 = vmatpush1.msra.mxu0 0.0
  %568 = vmatprep.subr.mxu0 0.0
  %569 = vmatpush1.msra.mxu0 0.0
  %570 = vmatprep.subr.mxu0 0.0
  %571 = vmatpush1.msra.mxu0 0.0
  %572 = vmatprep.subr.mxu0 0.0
  %573 = vmatpush1.msra.mxu0 0.0
  %574 = vmatprep.subr.mxu0 0.0
  %575 = vmatpush1.msra.mxu0 0.0
  %576 = vmatprep.subr.mxu0 0.0
  %577 = vmatpush1.msra.mxu0 0.0
  %578 = vmatprep.subr.mxu0 0.0
  %579 = vmatpush1.msra.mxu0 0.0
  %580 = vmatprep.subr.mxu0 0.0
  %581 = vmatpush1.msra.mxu0 0.0
  %582 = vmatprep.subr.mxu0 0.0
  %583 = vmatpush1.msra.mxu0 0.0
  %584 = vmatprep.subr.mxu0 0.0
  %585 = vmatpush1.msra.mxu0 0.0
  %586 = vmatprep.subr.mxu0 0.0
  %587 = vmatpush1.msra.mxu0 0.0
  %588 = vmatprep.mubr.f32.mxu0 0.0
  %589 = vmatmul.mubr.f32.gmra.mrb[0].mxu0 %v519
  %v590 = vpop.f32.mrb[0].mxu0
  %v591 = vadd.f32 0.0, %v590
  %v592 = vpop.f32.mrb[0].mxu0
  %593 = vmatprep.mubr.f32.mxu0 0.0
  %594 = vmatmul.mubr.f32.gmra.mrb[0].mxu0 %v522
  %v595 = vpop.f32.mrb[0].mxu0
  %v596 = vadd.f32 0.0, %v595
  %v597 = vpop.f32.mrb[0].mxu0
  %598 = vdwg.mxu0
  %v600 = vsel %vm206, %v591, 0
  %v603 = vsel %vm206, %v596, 0
  %605 = vmatprep.subr.mxu0 0.0
  %606 = vmatpush1.msra.mxu0 %v100
  %607 = vmatprep.subr.mxu0 0.0
  %608 = vmatpush1.msra.mxu0 %v101
  %609 = vmatprep.subr.mxu0 0.0
  %610 = vmatpush1.msra.mxu0 0.0
  %611 = vmatprep.subr.mxu0 0.0
  %612 = vmatpush1.msra.mxu0 0.0
  %613 = vmatprep.subr.mxu0 0.0
  %614 = vmatpush1.msra.mxu0 0.0
  %615 = vmatprep.subr.mxu0 0.0
  %616 = vmatpush1.msra.mxu0 0.0
  %617 = vmatprep.subr.mxu0 0.0
  %618 = vmatpush1.msra.mxu0 0.0
  %619 = vmatprep.subr.mxu0 0.0
  %620 = vmatpush1.msra.mxu0 0.0
  %621 = vmatprep.subr.mxu0 0.0
  %622 = vmatpush1.msra.mxu0 0.0
  %623 = vmatprep.subr.mxu0 0.0
  %624 = vmatpush1.msra.mxu0 0.0
  %625 = vmatprep.subr.mxu0 0.0
  %626 = vmatpush1.msra.mxu0 0.0
  %627 = vmatprep.subr.mxu0 0.0
  %628 = vmatpush1.msra.mxu0 0.0
  %629 = vmatprep.subr.mxu0 0.0
  %630 = vmatpush1.msra.mxu0 0.0
  %631 = vmatprep.subr.mxu0 0.0
  %632 = vmatpush1.msra.mxu0 0.0
  %633 = vmatprep.subr.mxu0 0.0
  %634 = vmatpush1.msra.mxu0 0.0
  %635 = vmatprep.subr.mxu0 0.0
  %636 = vmatpush1.msra.mxu0 0.0
  %637 = vmatprep.subr.mxu0 0.0
  %638 = vmatpush1.msra.mxu0 0.0
  %639 = vmatprep.subr.mxu0 0.0
  %640 = vmatpush1.msra.mxu0 0.0
  %641 = vmatprep.subr.mxu0 0.0
  %642 = vmatpush1.msra.mxu0 0.0
  %643 = vmatprep.subr.mxu0 0.0
  %644 = vmatpush1.msra.mxu0 0.0
  %645 = vmatprep.subr.mxu0 0.0
  %646 = vmatpush1.msra.mxu0 0.0
  %647 = vmatprep.subr.mxu0 0.0
  %648 = vmatpush1.msra.mxu0 0.0
  %649 = vmatprep.subr.mxu0 0.0
  %650 = vmatpush1.msra.mxu0 0.0
  %651 = vmatprep.subr.mxu0 0.0
  %652 = vmatpush1.msra.mxu0 0.0
  %653 = vmatprep.subr.mxu0 0.0
  %654 = vmatpush1.msra.mxu0 0.0
  %655 = vmatprep.subr.mxu0 0.0
  %656 = vmatpush1.msra.mxu0 0.0
  %657 = vmatprep.subr.mxu0 0.0
  %658 = vmatpush1.msra.mxu0 0.0
  %659 = vmatprep.subr.mxu0 0.0
  %660 = vmatpush1.msra.mxu0 0.0
  %661 = vmatprep.subr.mxu0 0.0
  %662 = vmatpush1.msra.mxu0 0.0
  %663 = vmatprep.subr.mxu0 0.0
  %664 = vmatpush1.msra.mxu0 0.0
  %665 = vmatprep.subr.mxu0 0.0
  %666 = vmatpush1.msra.mxu0 0.0
  %667 = vmatprep.subr.mxu0 0.0
  %668 = vmatpush1.msra.mxu0 0.0
  %669 = vmatprep.mubr.f32.mxu0 0.0
  %670 = vmatmul.mubr.f32.gmra.mrb[0].mxu0 %v600
  %v671 = vpop.f32.mrb[0].mxu0
  %v672 = vadd.f32 0.0, %v671
  %v673 = vpop.f32.mrb[0].mxu0
  %674 = vmatprep.mubr.f32.mxu0 0.0
  %675 = vmatmul.mubr.f32.gmra.mrb[0].mxu0 %v603
  %v676 = vpop.f32.mrb[0].mxu0
  %v677 = vadd.f32 0.0, %v676
  %v678 = vpop.f32.mrb[0].mxu0
  %679 = vdwg.mxu0
  %v681 = vsel %vm206, %v391, 0
  %v684 = vsel %vm206, %v396, 0
  %686 = vmatprep.subr.mxu0 0.0
  %687 = vmatpush1.msra.mxu0 %v98
  %688 = vmatprep.subr.mxu0 0.0
  %689 = vmatpush1.msra.mxu0 %v99
  %690 = vmatprep.subr.mxu0 0.0
  %691 = vmatpush1.msra.mxu0 0.0
  %692 = vmatprep.subr.mxu0 0.0
  %693 = vmatpush1.msra.mxu0 0.0
  %694 = vmatprep.subr.mxu0 0.0
  %695 = vmatpush1.msra.mxu0 0.0
  %696 = vmatprep.subr.mxu0 0.0
  %697 = vmatpush1.msra.mxu0 0.0
  %698 = vmatprep.subr.mxu0 0.0
  %699 = vmatpush1.msra.mxu0 0.0
  %700 = vmatprep.subr.mxu0 0.0
  %701 = vmatpush1.msra.mxu0 0.0
  %702 = vmatprep.subr.mxu0 0.0
  %703 = vmatpush1.msra.mxu0 0.0
  %704 = vmatprep.subr.mxu0 0.0
  %705 = vmatpush1.msra.mxu0 0.0
  %706 = vmatprep.subr.mxu0 0.0
  %707 = vmatpush1.msra.mxu0 0.0
  %708 = vmatprep.subr.mxu0 0.0
  %709 = vmatpush1.msra.mxu0 0.0
  %710 = vmatprep.subr.mxu0 0.0
  %711 = vmatpush1.msra.mxu0 0.0
  %712 = vmatprep.subr.mxu0 0.0
  %713 = vmatpush1.msra.mxu0 0.0
  %714 = vmatprep.subr.mxu0 0.0
  %715 = vmatpush1.msra.mxu0 0.0
  %716 = vmatprep.subr.mxu0 0.0
  %717 = vmatpush1.msra.mxu0 0.0
  %718 = vmatprep.subr.mxu0 0.0
  %719 = vmatpush1.msra.mxu0 0.0
  %720 = vmatprep.subr.mxu0 0.0
  %721 = vmatpush1.msra.mxu0 0.0
  %722 = vmatprep.subr.mxu0 0.0
  %723 = vmatpush1.msra.mxu0 0.0
  %724 = vmatprep.subr.mxu0 0.0
  %725 = vmatpush1.msra.mxu0 0.0
  %726 = vmatprep.subr.mxu0 0.0
  %727 = vmatpush1.msra.mxu0 0.0
  %728 = vmatprep.subr.mxu0 0.0
  %729 = vmatpush1.msra.mxu0 0.0
  %730 = vmatprep.subr.mxu0 0.0
  %731 = vmatpush1.msra.mxu0 0.0
  %732 = vmatprep.subr.mxu0 0.0
  %733 = vmatpush1.msra.mxu0 0.0
  %734 = vmatprep.subr.mxu0 0.0
  %735 = vmatpush1.msra.mxu0 0.0
  %736 = vmatprep.subr.mxu0 0.0
  %737 = vmatpush1.msra.mxu0 0.0
  %738 = vmatprep.subr.mxu0 0.0
  %739 = vmatpush1.msra.mxu0 0.0
  %740 = vmatprep.subr.mxu0 0.0
  %741 = vmatpush1.msra.mxu0 0.0
  %742 = vmatprep.subr.mxu0 0.0
  %743 = vmatpush1.msra.mxu0 0.0
  %744 = vmatprep.subr.mxu0 0.0
  %745 = vmatpush1.msra.mxu0 0.0
  %746 = vmatprep.subr.mxu0 0.0
  %747 = vmatpush1.msra.mxu0 0.0
  %748 = vmatprep.subr.mxu0 0.0
  %749 = vmatpush1.msra.mxu0 0.0
  %750 = vmatprep.mubr.f32.mxu0 0.0
  %751 = vmatmul.mubr.f32.gmra.mrb[0].mxu0 %v681
  %v752 = vpop.f32.mrb[0].mxu0
  %v753 = vadd.f32 %v672, %v752
  %v754 = vpop.f32.mrb[0].mxu0
  %755 = vmatprep.mubr.f32.mxu0 0.0
  %756 = vmatmul.mubr.f32.gmra.mrb[0].mxu0 %v684
  %v757 = vpop.f32.mrb[0].mxu0
  %v758 = vadd.f32 %v677, %v757
  %v759 = vpop.f32.mrb[0].mxu0
  %760 = vdwg.mxu0
  %v761 = vadd.f32 %v62, %v753
  %v762 = vadd.f32 %v63, %v758
  %v763 = vlaneseq
  %v764 = vshrl.u32 %v763, 7
  %v765 = vsub.s32 1, %v764
  %v766 = vrot.slane %v114, %v765
  %v767 = vadd.f32 %v761, %v766
  %v768 = vadd.f32 %v762, %v766
  %v769 = vsel %vm24, %v767, 0.0
  %770 = vadd.xlane.f32.xlu0 %v769
  %v771 = vpop.xlane.xlu0 %770
  %v772 = vsel %vm24, %v768, 0.0
  %773 = vadd.xlane.f32.xlu0 %v772
  %v774 = vpop.xlane.xlu0 %773
  %v775 = vmul.f32 %v771, %v31
  %v776 = vmul.f32 %v774, %v31
  %v777 = vsub.f32 %v767, %v775
  %v778 = vsub.f32 %v768, %v776
  %v779 = vmul.f32 %v777, %v777
  %v780 = vmul.f32 %v778, %v778
  %v781 = vsel %vm24, %v779, 0.0
  %782 = vadd.xlane.f32.xlu0 %v781
  %v783 = vpop.xlane.xlu0 %782
  %v784 = vsel %vm24, %v780, 0.0
  %785 = vadd.xlane.f32.xlu0 %v784
  %v786 = vpop.xlane.xlu0 %785
  %v787 = vmul.f32 %v783, %v31
  %v788 = vmul.f32 %v786, %v31
  %v789 = vadd.f32 %v787, 1e-12
  %v790 = vadd.f32 %v788, 1e-12
  %v791 = vrsqrt.pop %v789
  %v792 = vrsqrt.pop %v790
  %v793 = vmul.f32 %v777, %v791
  %v794 = vmul.f32 %v778, %v792
  %v795 = vlaneseq
  %v796 = vshrl.u32 %v795, 7
  %v797 = vsub.s32 2, %v796
  %v798 = vrot.slane %v114, %v797
  %v799 = vmul.f32 %v793, %v798
  %v800 = vmul.f32 %v794, %v798
  %v801 = vlaneseq
  %v802 = vshrl.u32 %v801, 7
  %v803 = vsub.s32 3, %v802
  %v804 = vrot.slane %v114, %v803
  %v805 = vadd.f32 %v799, %v804
  %v806 = vadd.f32 %v800, %v804
  %v807 = vlaneseq
  %v808 = vshrl.u32 %v807, 7
  %v809 = vsub.s32 4, %v808
  %v810 = vrot.slane %v114, %v809
  %v812 = vsel %vm24, %v805, 0
  %v815 = vsel %vm24, %v806, 0
  %817 = vmatprep.subr.mxu0 0.0
  %818 = vmatpush1.msra.mxu0 %v102
  %819 = vmatprep.subr.mxu0 0.0
  %820 = vmatpush1.msra.mxu0 %v103
  %821 = vmatprep.subr.mxu0 0.0
  %822 = vmatpush1.msra.mxu0 %v104
  %823 = vmatprep.subr.mxu0 0.0
  %824 = vmatpush1.msra.mxu0 %v105
  %825 = vmatprep.subr.mxu0 0.0
  %826 = vmatpush1.msra.mxu0 0.0
  %827 = vmatprep.subr.mxu0 0.0
  %828 = vmatpush1.msra.mxu0 0.0
  %829 = vmatprep.subr.mxu0 0.0
  %830 = vmatpush1.msra.mxu0 0.0
  %831 = vmatprep.subr.mxu0 0.0
  %832 = vmatpush1.msra.mxu0 0.0
  %833 = vmatprep.subr.mxu0 0.0
  %834 = vmatpush1.msra.mxu0 0.0
  %835 = vmatprep.subr.mxu0 0.0
  %836 = vmatpush1.msra.mxu0 0.0
  %837 = vmatprep.subr.mxu0 0.0
  %838 = vmatpush1.msra.mxu0 0.0
  %839 = vmatprep.subr.mxu0 0.0
  %840 = vmatpush1.msra.mxu0 0.0
  %841 = vmatprep.subr.mxu0 0.0
  %842 = vmatpush1.msra.mxu0 0.0
  %843 = vmatprep.subr.mxu0 0.0
  %844 = vmatpush1.msra.mxu0 0.0
  %845 = vmatprep.subr.mxu0 0.0
  %846 = vmatpush1.msra.mxu0 0.0
  %847 = vmatprep.subr.mxu0 0.0
  %848 = vmatpush1.msra.mxu0 0.0
  %849 = vmatprep.subr.mxu0 0.0
  %850 = vmatpush1.msra.mxu0 0.0
  %851 = vmatprep.subr.mxu0 0.0
  %852 = vmatpush1.msra.mxu0 0.0
  %853 = vmatprep.subr.mxu0 0.0
  %854 = vmatpush1.msra.mxu0 0.0
  %855 = vmatprep.subr.mxu0 0.0
  %856 = vmatpush1.msra.mxu0 0.0
  %857 = vmatprep.subr.mxu0 0.0
  %858 = vmatpush1.msra.mxu0 0.0
  %859 = vmatprep.subr.mxu0 0.0
  %860 = vmatpush1.msra.mxu0 0.0
  %861 = vmatprep.subr.mxu0 0.0
  %862 = vmatpush1.msra.mxu0 0.0
  %863 = vmatprep.subr.mxu0 0.0
  %864 = vmatpush1.msra.mxu0 0.0
  %865 = vmatprep.subr.mxu0 0.0
  %866 = vmatpush1.msra.mxu0 0.0
  %867 = vmatprep.subr.mxu0 0.0
  %868 = vmatpush1.msra.mxu0 0.0
  %869 = vmatprep.subr.mxu0 0.0
  %870 = vmatpush1.msra.mxu0 0.0
  %871 = vmatprep.subr.mxu0 0.0
  %872 = vmatpush1.msra.mxu0 0.0
  %873 = vmatprep.subr.mxu0 0.0
  %874 = vmatpush1.msra.mxu0 0.0
  %875 = vmatprep.subr.mxu0 0.0
  %876 = vmatpush1.msra.mxu0 0.0
  %877 = vmatprep.subr.mxu0 0.0
  %878 = vmatpush1.msra.mxu0 0.0
  %879 = vmatprep.subr.mxu0 0.0
  %880 = vmatpush1.msra.mxu0 0.0
  %881 = vmatprep.mubr.f32.mxu0 0.0
  %882 = vmatmul.mubr.f32.gmra.mrb[0].mxu0 %v812
  %v883 = vpop.f32.mrb[0].mxu0
  %v884 = vadd.f32 %v810, %v883
  %v885 = vpop.f32.mrb[0].mxu0
  %886 = vmatprep.mubr.f32.mxu0 0.0
  %887 = vmatmul.mubr.f32.gmra.mrb[0].mxu0 %v815
  %v888 = vpop.f32.mrb[0].mxu0
  %v889 = vadd.f32 %v810, %v888
  %v890 = vpop.f32.mrb[0].mxu0
  %891 = vdwg.mxu0
  %v892 = vmul.f32 %v884, %v884
  %v893 = vmul.f32 %v889, %v889
  %v894 = vmul.f32 %v884, %v892
  %v895 = vmul.f32 %v889, %v893
  %v896 = vmul.f32 %v894, 0.044715
  %v897 = vmul.f32 %v895, 0.044715
  %v898 = vadd.f32 %v884, %v896
  %v899 = vadd.f32 %v889, %v897
  %v900 = vmul.f32 %v898, 0.7978846
  %v901 = vmul.f32 %v899, 0.7978846
  %v902 = vtanh.pop %v900
  %v903 = vtanh.pop %v901
  %v904 = vadd.f32 %v902, 1.0
  %v905 = vadd.f32 %v903, 1.0
  %v906 = vmul.f32 %v904, 0.5
  %v907 = vmul.f32 %v905, 0.5
  %v908 = vmul.f32 %v884, %v906
  %v909 = vmul.f32 %v889, %v907
  %v910 = vlaneseq
  %v911 = vshrl.u32 %v910, 7
  %v912 = vsub.s32 5, %v911
  %v913 = vrot.slane %v114, %v912
  %vm914 = vcmask 523264
  %v916 = vsel %vm914, %v908, 0
  %v919 = vsel %vm914, %v909, 0
  %921 = vmatprep.subr.mxu0 0.0
  %922 = vmatpush1.msra.mxu0 %v106
  %923 = vmatprep.subr.mxu0 0.0
  %924 = vmatpush1.msra.mxu0 %v107
  %925 = vmatprep.subr.mxu0 0.0
  %926 = vmatpush1.msra.mxu0 %v108
  %927 = vmatprep.subr.mxu0 0.0
  %928 = vmatpush1.msra.mxu0 %v109
  %929 = vmatprep.subr.mxu0 0.0
  %930 = vmatpush1.msra.mxu0 %v110
  %931 = vmatprep.subr.mxu0 0.0
  %932 = vmatpush1.msra.mxu0 %v111
  %933 = vmatprep.subr.mxu0 0.0
  %934 = vmatpush1.msra.mxu0 %v112
  %935 = vmatprep.subr.mxu0 0.0
  %936 = vmatpush1.msra.mxu0 %v113
  %937 = vmatprep.subr.mxu0 0.0
  %938 = vmatpush1.msra.mxu0 0.0
  %939 = vmatprep.subr.mxu0 0.0
  %940 = vmatpush1.msra.mxu0 0.0
  %941 = vmatprep.subr.mxu0 0.0
  %942 = vmatpush1.msra.mxu0 0.0
  %943 = vmatprep.subr.mxu0 0.0
  %944 = vmatpush1.msra.mxu0 0.0
  %945 = vmatprep.subr.mxu0 0.0
  %946 = vmatpush1.msra.mxu0 0.0
  %947 = vmatprep.subr.mxu0 0.0
  %948 = vmatpush1.msra.mxu0 0.0
  %949 = vmatprep.subr.mxu0 0.0
  %950 = vmatpush1.msra.mxu0 0.0
  %951 = vmatprep.subr.mxu0 0.0
  %952 = vmatpush1.msra.mxu0 0.0
  %953 = vmatprep.subr.mxu0 0.0
  %954 = vmatpush1.msra.mxu0 0.0
  %955 = vmatprep.subr.mxu0 0.0
  %956 = vmatpush1.msra.mxu0 0.0
  %957 = vmatprep.subr.mxu0 0.0
  %958 = vmatpush1.msra.mxu0 0.0
  %959 = vmatprep.subr.mxu0 0.0
  %960 = vmatpush1.msra.mxu0 0.0
  %961 = vmatprep.subr.mxu0 0.0
  %962 = vmatpush1.msra.mxu0 0.0
  %963 = vmatprep.subr.mxu0 0.0
  %964 = vmatpush1.msra.mxu0 0.0
  %965 = vmatprep.subr.mxu0 0.0
  %966 = vmatpush1.msra.mxu0 0.0
  %967 = vmatprep.subr.mxu0 0.0
  %968 = vmatpush1.msra.mxu0 0.0
  %969 = vmatprep.subr.mxu0 0.0
  %970 = vmatpush1.msra.mxu0 0.0
  %971 = vmatprep.subr.mxu0 0.0
  %972 = vmatpush1.msra.mxu0 0.0
  %973 = vmatprep.subr.mxu0 0.0
  %974 = vmatpush1.msra.mxu0 0.0
  %975 = vmatprep.subr.mxu0 0.0
  %976 = vmatpush1.msra.mxu0 0.0
  %977 = vmatprep.subr.mxu0 0.0
  %978 = vmatpush1.msra.mxu0 0.0
  %979 = vmatprep.subr.mxu0 0.0
  %980 = vmatpush1.msra.mxu0 0.0
  %981 = vmatprep.subr.mxu0 0.0
  %982 = vmatpush1.msra.mxu0 0.0
  %983 = vmatprep.subr.mxu0 0.0
  %984 = vmatpush1.msra.mxu0 0.0
  %985 = vmatprep.mubr.f32.mxu0 0.0
  %986 = vmatmul.mubr.f32.gmra.mrb[0].mxu0 %v916
  %v987 = vpop.f32.mrb[0].mxu0
  %v988 = vadd.f32 %v913, %v987
  %v989 = vpop.f32.mrb[0].mxu0
  %990 = vmatprep.mubr.f32.mxu0 0.0
  %991 = vmatmul.mubr.f32.gmra.mrb[0].mxu0 %v919
  %v992 = vpop.f32.mrb[0].mxu0
  %v993 = vadd.f32 %v913, %v992
  %v994 = vpop.f32.mrb[0].mxu0
  %995 = vdwg.mxu0
  %v996 = vadd.f32 %v805, %v988
  %v997 = vadd.f32 %v806, %v993
  %v998 = vsel %vm24, %v996, 0.0
  %999 = vadd.xlane.f32.xlu0 %v998
  %v1000 = vpop.xlane.xlu0 %999
  %v1001 = vsel %vm24, %v997, 0.0
  %1002 = vadd.xlane.f32.xlu0 %v1001
  %v1003 = vpop.xlane.xlu0 %1002
  %v1004 = vmul.f32 %v1000, %v31
  %v1005 = vmul.f32 %v1003, %v31
  %v1006 = vsub.f32 %v996, %v1004
  %v1007 = vsub.f32 %v997, %v1005
  %v1008 = vmul.f32 %v1006, %v1006
  %v1009 = vmul.f32 %v1007, %v1007
  %v1010 = vsel %vm24, %v1008, 0.0
  %1011 = vadd.xlane.f32.xlu0 %v1010
  %v1012 = vpop.xlane.xlu0 %1011
  %v1013 = vsel %vm24, %v1009, 0.0
  %1014 = vadd.xlane.f32.xlu0 %v1013
  %v1015 = vpop.xlane.xlu0 %1014
  %v1016 = vmul.f32 %v1012, %v31
  %v1017 = vmul.f32 %v1015, %v31
  %v1018 = vadd.f32 %v1016, 1e-12
  %v1019 = vadd.f32 %v1017, 1e-12
  %v1020 = vrsqrt.pop %v1018
  %v1021 = vrsqrt.pop %v1019
  %v1022 = vmul.f32 %v1006, %v1020
  %v1023 = vmul.f32 %v1007, %v1021
  %v1024 = vlaneseq
  %v1025 = vshrl.u32 %v1024, 7
  %v1026 = vsub.s32 6, %v1025
  %v1027 = vrot.slane %v114, %v1026
  %v1028 = vmul.f32 %v1022, %v1027
  %v1029 = vmul.f32 %v1023, %v1027
  %v1030 = vlaneseq
  %v1031 = vshrl.u32 %v1030, 7
  %v1032 = vsub.s32 7, %v1031
  %v1033 = vrot.slane %v114, %v1032
  %v1034 = vadd.f32 %v1028, %v1033
  %v1035 = vadd.f32 %v1029, %v1033
  %s1036 = scalar_lea.vmem %s3, 168
  %v1037 = vld [vmem:[%s1036] sm:$0xff]
  %v1038 = vld [vmem:[%s1036 + $0x8] sm:$0xff]
  %v1039 = vld [vmem:[%s1036 + $0x10] sm:$0xff]
  %v1040 = vld [vmem:[%s1036 + $0x18] sm:$0xff]
  %v1041 = vld [vmem:[%s1036 + $0x20] sm:$0xff]
  %v1042 = vld [vmem:[%s1036 + $0x28] sm:$0xff]
  %v1043 = vld [vmem:[%s1036 + $0x30] sm:$0xff]
  %v1044 = vld [vmem:[%s1036 + $0x38] sm:$0xff]
  %v1045 = vld [vmem:[%s1036 + $0x40] sm:$0xff]
  %v1046 = vld [vmem:[%s1036 + $0x48] sm:$0xff]
  %v1047 = vld [vmem:[%s1036 + $0x50] sm:$0xff]
  %v1048 = vld [vmem:[%s1036 + $0x58] sm:$0xff]
  %v1049 = vld [vmem:[%s1036 + $0x60] sm:$0xff]
  %v1050 = vld [vmem:[%s1036 + $0x68] sm:$0xff]
  %v1051 = vld [vmem:[%s1036 + $0x70] sm:$0xff]
  %v1052 = vld [vmem:[%s1036 + $0x78] sm:$0xff]
  %v1053 = vld [vmem:[%s1036 + $0x80] sm:$0xff]
  %v1054 = vld [vmem:[%s1036 + $0x88] sm:$0xff]
  %v1055 = vld [vmem:[%s1036 + $0x90] sm:$0xff]
  %v1056 = vld [vmem:[%s1036 + $0x98] sm:$0xff]
  %v1057 = vld [vmem:[%s1036 + $0xa0] sm:$0xff]
  %v1058 = vlaneseq
  %v1059 = vshrl.u32 %v1058, 7
  %v1060 = vsub.s32 0, %v1059
  %v1061 = vrot.slane %v1057, %v1060
  %v1063 = vsel %vm24, %v1034, 0
  %v1066 = vsel %vm24, %v1035, 0
  %1068 = vmatprep.subr.mxu0 0.0
  %1069 = vmatpush1.msra.mxu0 %v1037
  %1070 = vmatprep.subr.mxu0 0.0
  %1071 = vmatpush1.msra.mxu0 %v1038
  %1072 = vmatprep.subr.mxu0 0.0
  %1073 = vmatpush1.msra.mxu0 %v1039
  %1074 = vmatprep.subr.mxu0 0.0
  %1075 = vmatpush1.msra.mxu0 %v1040
  %1076 = vmatprep.subr.mxu0 0.0
  %1077 = vmatpush1.msra.mxu0 0.0
  %1078 = vmatprep.subr.mxu0 0.0
  %1079 = vmatpush1.msra.mxu0 0.0
  %1080 = vmatprep.subr.mxu0 0.0
  %1081 = vmatpush1.msra.mxu0 0.0
  %1082 = vmatprep.subr.mxu0 0.0
  %1083 = vmatpush1.msra.mxu0 0.0
  %1084 = vmatprep.subr.mxu0 0.0
  %1085 = vmatpush1.msra.mxu0 0.0
  %1086 = vmatprep.subr.mxu0 0.0
  %1087 = vmatpush1.msra.mxu0 0.0
  %1088 = vmatprep.subr.mxu0 0.0
  %1089 = vmatpush1.msra.mxu0 0.0
  %1090 = vmatprep.subr.mxu0 0.0
  %1091 = vmatpush1.msra.mxu0 0.0
  %1092 = vmatprep.subr.mxu0 0.0
  %1093 = vmatpush1.msra.mxu0 0.0
  %1094 = vmatprep.subr.mxu0 0.0
  %1095 = vmatpush1.msra.mxu0 0.0
  %1096 = vmatprep.subr.mxu0 0.0
  %1097 = vmatpush1.msra.mxu0 0.0
  %1098 = vmatprep.subr.mxu0 0.0
  %1099 = vmatpush1.msra.mxu0 0.0
  %1100 = vmatprep.subr.mxu0 0.0
  %1101 = vmatpush1.msra.mxu0 0.0
  %1102 = vmatprep.subr.mxu0 0.0
  %1103 = vmatpush1.msra.mxu0 0.0
  %1104 = vmatprep.subr.mxu0 0.0
  %1105 = vmatpush1.msra.mxu0 0.0
  %1106 = vmatprep.subr.mxu0 0.0
  %1107 = vmatpush1.msra.mxu0 0.0
  %1108 = vmatprep.subr.mxu0 0.0
  %1109 = vmatpush1.msra.mxu0 0.0
  %1110 = vmatprep.subr.mxu0 0.0
  %1111 = vmatpush1.msra.mxu0 0.0
  %1112 = vmatprep.subr.mxu0 0.0
  %1113 = vmatpush1.msra.mxu0 0.0
  %1114 = vmatprep.subr.mxu0 0.0
  %1115 = vmatpush1.msra.mxu0 0.0
  %1116 = vmatprep.subr.mxu0 0.0
  %1117 = vmatpush1.msra.mxu0 0.0
  %1118 = vmatprep.subr.mxu0 0.0
  %1119 = vmatpush1.msra.mxu0 0.0
  %1120 = vmatprep.subr.mxu0 0.0
  %1121 = vmatpush1.msra.mxu0 0.0
  %1122 = vmatprep.subr.mxu0 0.0
  %1123 = vmatpush1.msra.mxu0 0.0
  %1124 = vmatprep.subr.mxu0 0.0
  %1125 = vmatpush1.msra.mxu0 0.0
  %1126 = vmatprep.subr.mxu0 0.0
  %1127 = vmatpush1.msra.mxu0 0.0
  %1128 = vmatprep.subr.mxu0 0.0
  %1129 = vmatpush1.msra.mxu0 0.0
  %1130 = vmatprep.subr.mxu0 0.0
  %1131 = vmatpush1.msra.mxu0 0.0
  %1132 = vmatprep.mubr.f32.mxu0 0.0
  %1133 = vmatmul.mubr.f32.gmra.mrb[0].mxu0 %v1063
  %v1134 = vpop.f32.mrb[0].mxu0
  %v1135 = vadd.f32 %v1061, %v1134
  %v1136 = vpop.f32.mrb[0].mxu0
  %1137 = vmatprep.mubr.f32.mxu0 0.0
  %1138 = vmatmul.mubr.f32.gmra.mrb[0].mxu0 %v1066
  %v1139 = vpop.f32.mrb[0].mxu0
  %v1140 = vadd.f32 %v1061, %v1139
  %v1141 = vpop.f32.mrb[0].mxu0
  %1142 = vdwg.mxu0
  %1145 = vrot.lane.b32.xlu0 %v1135, 96
  %v1146 = vpop.permute.xlu0 %1145
  %1147 = vrot.lane.b32.xlu0 %v1140, 96
  %v1148 = vpop.permute.xlu0 %1147
  %v1149 = vsel %vm206, %v1135, 0
  %v1151 = vsel %vm206, %v1140, 0
  %v1153 = vsel %vm206, %v1146, 0
  %v1155 = vsel %vm206, %v1148, 0
  %1157 = vmatprep.subr.mxu0 0.0
  %1158 = vmatpush1.xpose.msra.mxu0 %v1153
  %1159 = vmatprep.subr.mxu0 0.0
  %1160 = vmatpush1.xpose.msra.mxu0 %v1155
  %1161 = vmatprep.subr.mxu0 0.0
  %1162 = vmatpush1.xpose.msra.mxu0 0.0
  %1163 = vmatprep.subr.mxu0 0.0
  %1164 = vmatpush1.xpose.msra.mxu0 0.0
  %1165 = vmatprep.subr.mxu0 0.0
  %1166 = vmatpush1.xpose.msra.mxu0 0.0
  %1167 = vmatprep.subr.mxu0 0.0
  %1168 = vmatpush1.xpose.msra.mxu0 0.0
  %1169 = vmatprep.subr.mxu0 0.0
  %1170 = vmatpush1.xpose.msra.mxu0 0.0
  %1171 = vmatprep.subr.mxu0 0.0
  %1172 = vmatpush1.xpose.msra.mxu0 0.0
  %1173 = vmatprep.subr.mxu0 0.0
  %1174 = vmatpush1.xpose.msra.mxu0 0.0
  %1175 = vmatprep.subr.mxu0 0.0
  %1176 = vmatpush1.xpose.msra.mxu0 0.0
  %1177 = vmatprep.subr.mxu0 0.0
  %1178 = vmatpush1.xpose.msra.mxu0 0.0
  %1179 = vmatprep.subr.mxu0 0.0
  %1180 = vmatpush1.xpose.msra.mxu0 0.0
  %1181 = vmatprep.subr.mxu0 0.0
  %1182 = vmatpush1.xpose.msra.mxu0 0.0
  %1183 = vmatprep.subr.mxu0 0.0
  %1184 = vmatpush1.xpose.msra.mxu0 0.0
  %1185 = vmatprep.subr.mxu0 0.0
  %1186 = vmatpush1.xpose.msra.mxu0 0.0
  %1187 = vmatprep.subr.mxu0 0.0
  %1188 = vmatpush1.xpose.msra.mxu0 0.0
  %1189 = vmatprep.subr.mxu0 0.0
  %1190 = vmatpush1.xpose.msra.mxu0 0.0
  %1191 = vmatprep.subr.mxu0 0.0
  %1192 = vmatpush1.xpose.msra.mxu0 0.0
  %1193 = vmatprep.subr.mxu0 0.0
  %1194 = vmatpush1.xpose.msra.mxu0 0.0
  %1195 = vmatprep.subr.mxu0 0.0
  %1196 = vmatpush1.xpose.msra.mxu0 0.0
  %1197 = vmatprep.subr.mxu0 0.0
  %1198 = vmatpush1.xpose.msra.mxu0 0.0
  %1199 = vmatprep.subr.mxu0 0.0
  %1200 = vmatpush1.xpose.msra.mxu0 0.0
  %1201 = vmatprep.subr.mxu0 0.0
  %1202 = vmatpush1.xpose.msra.mxu0 0.0
  %1203 = vmatprep.subr.mxu0 0.0
  %1204 = vmatpush1.xpose.msra.mxu0 0.0
  %1205 = vmatprep.subr.mxu0 0.0
  %1206 = vmatpush1.xpose.msra.mxu0 0.0
  %1207 = vmatprep.subr.mxu0 0.0
  %1208 = vmatpush1.xpose.msra.mxu0 0.0
  %1209 = vmatprep.subr.mxu0 0.0
  %1210 = vmatpush1.xpose.msra.mxu0 0.0
  %1211 = vmatprep.subr.mxu0 0.0
  %1212 = vmatpush1.xpose.msra.mxu0 0.0
  %1213 = vmatprep.subr.mxu0 0.0
  %1214 = vmatpush1.xpose.msra.mxu0 0.0
  %1215 = vmatprep.subr.mxu0 0.0
  %1216 = vmatpush1.xpose.msra.mxu0 0.0
  %1217 = vmatprep.subr.mxu0 0.0
  %1218 = vmatpush1.xpose.msra.mxu0 0.0
  %1219 = vmatprep.subr.mxu0 0.0
  %1220 = vmatpush1.xpose.msra.mxu0 0.0
  %1221 = vmatprep.mubr.f32.mxu0 0.0
  %1222 = vmatmul.mubr.f32.gmra.mrb[0].mxu0 %v1149
  %v1223 = vpop.f32.mrb[0].mxu0
  %v1224 = vadd.f32 %v92, %v1223
  %v1225 = vpop.f32.mrb[0].mxu0
  %1226 = vmatprep.mubr.f32.mxu0 0.0
  %1227 = vmatmul.mubr.f32.gmra.mrb[0].mxu0 %v1151
  %v1228 = vpop.f32.mrb[0].mxu0
  %v1229 = vadd.f32 %v93, %v1228
  %v1230 = vpop.f32.mrb[0].mxu0
  %1231 = vdwg.mxu0
  %v1232 = vsel %vm206, %v1224, -inf
  %1233 = vmax.xlane.f32.xlu0 %v1232
  %v1234 = vpop.xlane.xlu0 %1233
  %v1235 = vsel %vm206, %v1229, -inf
  %1236 = vmax.xlane.f32.xlu0 %v1235
  %v1237 = vpop.xlane.xlu0 %1236
  %v1238 = vsub.f32 %v1224, %v1234
  %v1239 = vsub.f32 %v1229, %v1237
  %v1240 = vmul.f32 %v1238, 1.442695
  %v1241 = vpow.pop %v1240
  %v1242 = vmul.f32 %v1239, 1.442695
  %v1243 = vpow.pop %v1242
  %v1244 = vsel %vm206, %v1241, 0.0
  %1245 = vadd.xlane.f32.xlu0 %v1244
  %v1246 = vpop.xlane.xlu0 %1245
  %v1247 = vsel %vm206, %v1243, 0.0
  %1248 = vadd.xlane.f32.xlu0 %v1247
  %v1249 = vpop.xlane.xlu0 %1248
  %v1250 = vrcp.pop %v1246
  %v1251 = vrcp.pop %v1249
  %v1252 = vmul.f32 %v1241, %v1250
  %v1253 = vmul.f32 %v1243, %v1251
  %1254 = vrot.lane.b32.xlu0 %v1135, 64
  %v1255 = vpop.permute.xlu0 %1254
  %1256 = vrot.lane.b32.xlu0 %v1140, 64
  %v1257 = vpop.permute.xlu0 %1256
  %v1261 = vsel %vm206, %v1252, 0
  %v1264 = vsel %vm206, %v1253, 0
  %1266 = vmatprep.subr.mxu0 0.0
  %1267 = vmatpush1.msra.mxu0 %v1255
  %1268 = vmatprep.subr.mxu0 0.0
  %1269 = vmatpush1.msra.mxu0 %v1257
  %1270 = vmatprep.subr.mxu0 0.0
  %1271 = vmatpush1.msra.mxu0 0.0
  %1272 = vmatprep.subr.mxu0 0.0
  %1273 = vmatpush1.msra.mxu0 0.0
  %1274 = vmatprep.subr.mxu0 0.0
  %1275 = vmatpush1.msra.mxu0 0.0
  %1276 = vmatprep.subr.mxu0 0.0
  %1277 = vmatpush1.msra.mxu0 0.0
  %1278 = vmatprep.subr.mxu0 0.0
  %1279 = vmatpush1.msra.mxu0 0.0
  %1280 = vmatprep.subr.mxu0 0.0
  %1281 = vmatpush1.msra.mxu0 0.0
  %1282 = vmatprep.subr.mxu0 0.0
  %1283 = vmatpush1.msra.mxu0 0.0
  %1284 = vmatprep.subr.mxu0 0.0
  %1285 = vmatpush1.msra.mxu0 0.0
  %1286 = vmatprep.subr.mxu0 0.0
  %1287 = vmatpush1.msra.mxu0 0.0
  %1288 = vmatprep.subr.mxu0 0.0
  %1289 = vmatpush1.msra.mxu0 0.0
  %1290 = vmatprep.subr.mxu0 0.0
  %1291 = vmatpush1.msra.mxu0 0.0
  %1292 = vmatprep.subr.mxu0 0.0
  %1293 = vmatpush1.msra.mxu0 0.0
  %1294 = vmatprep.subr.mxu0 0.0
  %1295 = vmatpush1.msra.mxu0 0.0
  %1296 = vmatprep.subr.mxu0 0.0
  %1297 = vmatpush1.msra.mxu0 0.0
  %1298 = vmatprep.subr.mxu0 0.0
  %1299 = vmatpush1.msra.mxu0 0.0
  %1300 = vmatprep.subr.mxu0 0.0
  %1301 = vmatpush1.msra.mxu0 0.0
  %1302 = vmatprep.subr.mxu0 0.0
  %1303 = vmatpush1.msra.mxu0 0.0
  %1304 = vmatprep.subr.mxu0 0.0
  %1305 = vmatpush1.msra.mxu0 0.0
  %1306 = vmatprep.subr.mxu0 0.0
  %1307 = vmatpush1.msra.mxu0 0.0
  %1308 = vmatprep.subr.mxu0 0.0
  %1309 = vmatpush1.msra.mxu0 0.0
  %1310 = vmatprep.subr.mxu0 0.0
  %1311 = vmatpush1.msra.mxu0 0.0
  %1312 = vmatprep.subr.mxu0 0.0
  %1313 = vmatpush1.msra.mxu0 0.0
  %1314 = vmatprep.subr.mxu0 0.0
  %1315 = vmatpush1.msra.mxu0 0.0
  %1316 = vmatprep.subr.mxu0 0.0
  %1317 = vmatpush1.msra.mxu0 0.0
  %1318 = vmatprep.subr.mxu0 0.0
  %1319 = vmatpush1.msra.mxu0 0.0
  %1320 = vmatprep.subr.mxu0 0.0
  %1321 = vmatpush1.msra.mxu0 0.0
  %1322 = vmatprep.subr.mxu0 0.0
  %1323 = vmatpush1.msra.mxu0 0.0
  %1324 = vmatprep.subr.mxu0 0.0
  %1325 = vmatpush1.msra.mxu0 0.0
  %1326 = vmatprep.subr.mxu0 0.0
  %1327 = vmatpush1.msra.mxu0 0.0
  %1328 = vmatprep.subr.mxu0 0.0
  %1329 = vmatpush1.msra.mxu0 0.0
  %1330 = vmatprep.mubr.f32.mxu0 0.0
  %1331 = vmatmul.mubr.f32.gmra.mrb[0].mxu0 %v1261
  %v1332 = vpop.f32.mrb[0].mxu0
  %v1333 = vadd.f32 0.0, %v1332
  %v1334 = vpop.f32.mrb[0].mxu0
  %1335 = vmatprep.mubr.f32.mxu0 0.0
  %1336 = vmatmul.mubr.f32.gmra.mrb[0].mxu0 %v1264
  %v1337 = vpop.f32.mrb[0].mxu0
  %v1338 = vadd.f32 0.0, %v1337
  %v1339 = vpop.f32.mrb[0].mxu0
  %1340 = vdwg.mxu0
  %1341 = vrot.lane.b32.xlu0 %v1135, 112
  %v1342 = vpop.permute.xlu0 %1341
  %1343 = vrot.lane.b32.xlu0 %v1140, 112
  %v1344 = vpop.permute.xlu0 %1343
  %1345 = vrot.lane.b32.xlu0 %v1135, 80
  %v1346 = vpop.permute.xlu0 %1345
  %1347 = vrot.lane.b32.xlu0 %v1140, 80
  %v1348 = vpop.permute.xlu0 %1347
  %v1349 = vsel %vm206, %v1342, 0
  %v1351 = vsel %vm206, %v1344, 0
  %v1353 = vsel %vm206, %v1346, 0
  %v1355 = vsel %vm206, %v1348, 0
  %1357 = vmatprep.subr.mxu0 0.0
  %1358 = vmatpush1.xpose.msra.mxu0 %v1353
  %1359 = vmatprep.subr.mxu0 0.0
  %1360 = vmatpush1.xpose.msra.mxu0 %v1355
  %1361 = vmatprep.subr.mxu0 0.0
  %1362 = vmatpush1.xpose.msra.mxu0 0.0
  %1363 = vmatprep.subr.mxu0 0.0
  %1364 = vmatpush1.xpose.msra.mxu0 0.0
  %1365 = vmatprep.subr.mxu0 0.0
  %1366 = vmatpush1.xpose.msra.mxu0 0.0
  %1367 = vmatprep.subr.mxu0 0.0
  %1368 = vmatpush1.xpose.msra.mxu0 0.0
  %1369 = vmatprep.subr.mxu0 0.0
  %1370 = vmatpush1.xpose.msra.mxu0 0.0
  %1371 = vmatprep.subr.mxu0 0.0
  %1372 = vmatpush1.xpose.msra.mxu0 0.0
  %1373 = vmatprep.subr.mxu0 0.0
  %1374 = vmatpush1.xpose.msra.mxu0 0.0
  %1375 = vmatprep.subr.mxu0 0.0
  %1376 = vmatpush1.xpose.msra.mxu0 0.0
  %1377 = vmatprep.subr.mxu0 0.0
  %1378 = vmatpush1.xpose.msra.mxu0 0.0
  %1379 = vmatprep.subr.mxu0 0.0
  %1380 = vmatpush1.xpose.msra.mxu0 0.0
  %1381 = vmatprep.subr.mxu0 0.0
  %1382 = vmatpush1.xpose.msra.mxu0 0.0
  %1383 = vmatprep.subr.mxu0 0.0
  %1384 = vmatpush1.xpose.msra.mxu0 0.0
  %1385 = vmatprep.subr.mxu0 0.0
  %1386 = vmatpush1.xpose.msra.mxu0 0.0
  %1387 = vmatprep.subr.mxu0 0.0
  %1388 = vmatpush1.xpose.msra.mxu0 0.0
  %1389 = vmatprep.subr.mxu0 0.0
  %1390 = vmatpush1.xpose.msra.mxu0 0.0
  %1391 = vmatprep.subr.mxu0 0.0
  %1392 = vmatpush1.xpose.msra.mxu0 0.0
  %1393 = vmatprep.subr.mxu0 0.0
  %1394 = vmatpush1.xpose.msra.mxu0 0.0
  %1395 = vmatprep.subr.mxu0 0.0
  %1396 = vmatpush1.xpose.msra.mxu0 0.0
  %1397 = vmatprep.subr.mxu0 0.0
  %1398 = vmatpush1.xpose.msra.mxu0 0.0
  %1399 = vmatprep.subr.mxu0 0.0
  %1400 = vmatpush1.xpose.msra.mxu0 0.0
  %1401 = vmatprep.subr.mxu0 0.0
  %1402 = vmatpush1.xpose.msra.mxu0 0.0
  %1403 = vmatprep.subr.mxu0 0.0
  %1404 = vmatpush1.xpose.msra.mxu0 0.0
  %1405 = vmatprep.subr.mxu0 0.0
  %1406 = vmatpush1.xpose.msra.mxu0 0.0
  %1407 = vmatprep.subr.mxu0 0.0
  %1408 = vmatpush1.xpose.msra.mxu0 0.0
  %1409 = vmatprep.subr.mxu0 0.0
  %1410 = vmatpush1.xpose.msra.mxu0 0.0
  %1411 = vmatprep.subr.mxu0 0.0
  %1412 = vmatpush1.xpose.msra.mxu0 0.0
  %1413 = vmatprep.subr.mxu0 0.0
  %1414 = vmatpush1.xpose.msra.mxu0 0.0
  %1415 = vmatprep.subr.mxu0 0.0
  %1416 = vmatpush1.xpose.msra.mxu0 0.0
  %1417 = vmatprep.subr.mxu0 0.0
  %1418 = vmatpush1.xpose.msra.mxu0 0.0
  %1419 = vmatprep.subr.mxu0 0.0
  %1420 = vmatpush1.xpose.msra.mxu0 0.0
  %1421 = vmatprep.mubr.f32.mxu0 0.0
  %1422 = vmatmul.mubr.f32.gmra.mrb[0].mxu0 %v1349
  %v1423 = vpop.f32.mrb[0].mxu0
  %v1424 = vadd.f32 %v92, %v1423
  %v1425 = vpop.f32.mrb[0].mxu0
  %1426 = vmatprep.mubr.f32.mxu0 0.0
  %1427 = vmatmul.mubr.f32.gmra.mrb[0].mxu0 %v1351
  %v1428 = vpop.f32.mrb[0].mxu0
  %v1429 = vadd.f32 %v93, %v1428
  %v1430 = vpop.f32.mrb[0].mxu0
  %1431 = vdwg.mxu0
  %v1432 = vsel %vm206, %v1424, -inf
  %1433 = vmax.xlane.f32.xlu0 %v1432
  %v1434 = vpop.xlane.xlu0 %1433
  %v1435 = vsel %vm206, %v1429, -inf
  %1436 = vmax.xlane.f32.xlu0 %v1435
  %v1437 = vpop.xlane.xlu0 %1436
  %v1438 = vsub.f32 %v1424, %v1434
  %v1439 = vsub.f32 %v1429, %v1437
  %v1440 = vmul.f32 %v1438, 1.442695
  %v1441 = vpow.pop %v1440
  %v1442 = vmul.f32 %v1439, 1.442695
  %v1443 = vpow.pop %v1442
  %v1444 = vsel %vm206, %v1441, 0.0
  %1445 = vadd.xlane.f32.xlu0 %v1444
  %v1446 = vpop.xlane.xlu0 %1445
  %v1447 = vsel %vm206, %v1443, 0.0
  %1448 = vadd.xlane.f32.xlu0 %v1447
  %v1449 = vpop.xlane.xlu0 %1448
  %v1450 = vrcp.pop %v1446
  %v1451 = vrcp.pop %v1449
  %v1452 = vmul.f32 %v1441, %v1450
  %v1453 = vmul.f32 %v1443, %v1451
  %1454 = vrot.lane.b32.xlu0 %v1135, 48
  %v1455 = vpop.permute.xlu0 %1454
  %1456 = vrot.lane.b32.xlu0 %v1140, 48
  %v1457 = vpop.permute.xlu0 %1456
  %v1461 = vsel %vm206, %v1452, 0
  %v1464 = vsel %vm206, %v1453, 0
  %1466 = vmatprep.subr.mxu0 0.0
  %1467 = vmatpush1.msra.mxu0 %v1455
  %1468 = vmatprep.subr.mxu0 0.0
  %1469 = vmatpush1.msra.mxu0 %v1457
  %1470 = vmatprep.subr.mxu0 0.0
  %1471 = vmatpush1.msra.mxu0 0.0
  %1472 = vmatprep.subr.mxu0 0.0
  %1473 = vmatpush1.msra.mxu0 0.0
  %1474 = vmatprep.subr.mxu0 0.0
  %1475 = vmatpush1.msra.mxu0 0.0
  %1476 = vmatprep.subr.mxu0 0.0
  %1477 = vmatpush1.msra.mxu0 0.0
  %1478 = vmatprep.subr.mxu0 0.0
  %1479 = vmatpush1.msra.mxu0 0.0
  %1480 = vmatprep.subr.mxu0 0.0
  %1481 = vmatpush1.msra.mxu0 0.0
  %1482 = vmatprep.subr.mxu0 0.0
  %1483 = vmatpush1.msra.mxu0 0.0
  %1484 = vmatprep.subr.mxu0 0.0
  %1485 = vmatpush1.msra.mxu0 0.0
  %1486 = vmatprep.subr.mxu0 0.0
  %1487 = vmatpush1.msra.mxu0 0.0
  %1488 = vmatprep.subr.mxu0 0.0
  %1489 = vmatpush1.msra.mxu0 0.0
  %1490 = vmatprep.subr.mxu0 0.0
  %1491 = vmatpush1.msra.mxu0 0.0
  %1492 = vmatprep.subr.mxu0 0.0
  %1493 = vmatpush1.msra.mxu0 0.0
  %1494 = vmatprep.subr.mxu0 0.0
  %1495 = vmatpush1.msra.mxu0 0.0
  %1496 = vmatprep.subr.mxu0 0.0
  %1497 = vmatpush1.msra.mxu0 0.0
  %1498 = vmatprep.subr.mxu0 0.0
  %1499 = vmatpush1.msra.mxu0 0.0
  %1500 = vmatprep.subr.mxu0 0.0
  %1501 = vmatpush1.msra.mxu0 0.0
  %1502 = vmatprep.subr.mxu0 0.0
  %1503 = vmatpush1.msra.mxu0 0.0
  %1504 = vmatprep.subr.mxu0 0.0
  %1505 = vmatpush1.msra.mxu0 0.0
  %1506 = vmatprep.subr.mxu0 0.0
  %1507 = vmatpush1.msra.mxu0 0.0
  %1508 = vmatprep.subr.mxu0 0.0
  %1509 = vmatpush1.msra.mxu0 0.0
  %1510 = vmatprep.subr.mxu0 0.0
  %1511 = vmatpush1.msra.mxu0 0.0
  %1512 = vmatprep.subr.mxu0 0.0
  %1513 = vmatpush1.msra.mxu0 0.0
  %1514 = vmatprep.subr.mxu0 0.0
  %1515 = vmatpush1.msra.mxu0 0.0
  %1516 = vmatprep.subr.mxu0 0.0
  %1517 = vmatpush1.msra.mxu0 0.0
  %1518 = vmatprep.subr.mxu0 0.0
  %1519 = vmatpush1.msra.mxu0 0.0
  %1520 = vmatprep.subr.mxu0 0.0
  %1521 = vmatpush1.msra.mxu0 0.0
  %1522 = vmatprep.subr.mxu0 0.0
  %1523 = vmatpush1.msra.mxu0 0.0
  %1524 = vmatprep.subr.mxu0 0.0
  %1525 = vmatpush1.msra.mxu0 0.0
  %1526 = vmatprep.subr.mxu0 0.0
  %1527 = vmatpush1.msra.mxu0 0.0
  %1528 = vmatprep.subr.mxu0 0.0
  %1529 = vmatpush1.msra.mxu0 0.0
  %1530 = vmatprep.mubr.f32.mxu0 0.0
  %1531 = vmatmul.mubr.f32.gmra.mrb[0].mxu0 %v1461
  %v1532 = vpop.f32.mrb[0].mxu0
  %v1533 = vadd.f32 0.0, %v1532
  %v1534 = vpop.f32.mrb[0].mxu0
  %1535 = vmatprep.mubr.f32.mxu0 0.0
  %1536 = vmatmul.mubr.f32.gmra.mrb[0].mxu0 %v1464
  %v1537 = vpop.f32.mrb[0].mxu0
  %v1538 = vadd.f32 0.0, %v1537
  %v1539 = vpop.f32.mrb[0].mxu0
  %1540 = vdwg.mxu0
  %v1542 = vsel %vm206, %v1533, 0
  %v1545 = vsel %vm206, %v1538, 0
  %1547 = vmatprep.subr.mxu0 0.0
  %1548 = vmatpush1.msra.mxu0 %v1043
  %1549 = vmatprep.subr.mxu0 0.0
  %1550 = vmatpush1.msra.mxu0 %v1044
  %1551 = vmatprep.subr.mxu0 0.0
  %1552 = vmatpush1.msra.mxu0 0.0
  %1553 = vmatprep.subr.mxu0 0.0
  %1554 = vmatpush1.msra.mxu0 0.0
  %1555 = vmatprep.subr.mxu0 0.0
  %1556 = vmatpush1.msra.mxu0 0.0
  %1557 = vmatprep.subr.mxu0 0.0
  %1558 = vmatpush1.msra.mxu0 0.0
  %1559 = vmatprep.subr.mxu0 0.0
  %1560 = vmatpush1.msra.mxu0 0.0
  %1561 = vmatprep.subr.mxu0 0.0
  %1562 = vmatpush1.msra.mxu0 0.0
  %1563 = vmatprep.subr.mxu0 0.0
  %1564 = vmatpush1.msra.mxu0 0.0
  %1565 = vmatprep.subr.mxu0 0.0
  %1566 = vmatpush1.msra.mxu0 0.0
  %1567 = vmatprep.subr.mxu0 0.0
  %1568 = vmatpush1.msra.mxu0 0.0
  %1569 = vmatprep.subr.mxu0 0.0
  %1570 = vmatpush1.msra.mxu0 0.0
  %1571 = vmatprep.subr.mxu0 0.0
  %1572 = vmatpush1.msra.mxu0 0.0
  %1573 = vmatprep.subr.mxu0 0.0
  %1574 = vmatpush1.msra.mxu0 0.0
  %1575 = vmatprep.subr.mxu0 0.0
  %1576 = vmatpush1.msra.mxu0 0.0
  %1577 = vmatprep.subr.mxu0 0.0
  %1578 = vmatpush1.msra.mxu0 0.0
  %1579 = vmatprep.subr.mxu0 0.0
  %1580 = vmatpush1.msra.mxu0 0.0
  %1581 = vmatprep.subr.mxu0 0.0
  %1582 = vmatpush1.msra.mxu0 0.0
  %1583 = vmatprep.subr.mxu0 0.0
  %1584 = vmatpush1.msra.mxu0 0.0
  %1585 = vmatprep.subr.mxu0 0.0
  %1586 = vmatpush1.msra.mxu0 0.0
  %1587 = vmatprep.subr.mxu0 0.0
  %1588 = vmatpush1.msra.mxu0 0.0
  %1589 = vmatprep.subr.mxu0 0.0
  %1590 = vmatpush1.msra.mxu0 0.0
  %1591 = vmatprep.subr.mxu0 0.0
  %1592 = vmatpush1.msra.mxu0 0.0
  %1593 = vmatprep.subr.mxu0 0.0
  %1594 = vmatpush1.msra.mxu0 0.0
  %1595 = vmatprep.subr.mxu0 0.0
  %1596 = vmatpush1.msra.mxu0 0.0
  %1597 = vmatprep.subr.mxu0 0.0
  %1598 = vmatpush1.msra.mxu0 0.0
  %1599 = vmatprep.subr.mxu0 0.0
  %1600 = vmatpush1.msra.mxu0 0.0
  %1601 = vmatprep.subr.mxu0 0.0
  %1602 = vmatpush1.msra.mxu0 0.0
  %1603 = vmatprep.subr.mxu0 0.0
  %1604 = vmatpush1.msra.mxu0 0.0
  %1605 = vmatprep.subr.mxu0 0.0
  %1606 = vmatpush1.msra.mxu0 0.0
  %1607 = vmatprep.subr.mxu0 0.0
  %1608 = vmatpush1.msra.mxu0 0.0
  %1609 = vmatprep.subr.mxu0 0.0
  %1610 = vmatpush1.msra.mxu0 0.0
  %1611 = vmatprep.mubr.f32.mxu0 0.0
  %1612 = vmatmul.mubr.f32.gmra.mrb[0].mxu0 %v1542
  %v1613 = vpop.f32.mrb[0].mxu0
  %v1614 = vadd.f32 0.0, %v1613
  %v1615 = vpop.f32.mrb[0].mxu0
  %1616 = vmatprep.mubr.f32.mxu0 0.0
  %1617 = vmatmul.mubr.f32.gmra.mrb[0].mxu0 %v1545
  %v1618 = vpop.f32.mrb[0].mxu0
  %v1619 = vadd.f32 0.0, %v1618
  %v1620 = vpop.f32.mrb[0].mxu0
  %1621 = vdwg.mxu0
  %v1623 = vsel %vm206, %v1333, 0
  %v1626 = vsel %vm206, %v1338, 0
  %1628 = vmatprep.subr.mxu0 0.0
  %1629 = vmatpush1.msra.mxu0 %v1041
  %1630 = vmatprep.subr.mxu0 0.0
  %1631 = vmatpush1.msra.mxu0 %v1042
  %1632 = vmatprep.subr.mxu0 0.0
  %1633 = vmatpush1.msra.mxu0 0.0
  %1634 = vmatprep.subr.mxu0 0.0
  %1635 = vmatpush1.msra.mxu0 0.0
  %1636 = vmatprep.subr.mxu0 0.0
  %1637 = vmatpush1.msra.mxu0 0.0
  %1638 = vmatprep.subr.mxu0 0.0
  %1639 = vmatpush1.msra.mxu0 0.0
  %1640 = vmatprep.subr.mxu0 0.0
  %1641 = vmatpush1.msra.mxu0 0.0
  %1642 = vmatprep.subr.mxu0 0.0
  %1643 = vmatpush1.msra.mxu0 0.0
  %1644 = vmatprep.subr.mxu0 0.0
  %1645 = vmatpush1.msra.mxu0 0.0
  %1646 = vmatprep.subr.mxu0 0.0
  %1647 = vmatpush1.msra.mxu0 0.0
  %1648 = vmatprep.subr.mxu0 0.0
  %1649 = vmatpush1.msra.mxu0 0.0
  %1650 = vmatprep.subr.mxu0 0.0
  %1651 = vmatpush1.msra.mxu0 0.0
  %1652 = vmatprep.subr.mxu0 0.0
  %1653 = vmatpush1.msra.mxu0 0.0
  %1654 = vmatprep.subr.mxu0 0.0
  %1655 = vmatpush1.msra.mxu0 0.0
  %1656 = vmatprep.subr.mxu0 0.0
  %1657 = vmatpush1.msra.mxu0 0.0
  %1658 = vmatprep.subr.mxu0 0.0
  %1659 = vmatpush1.msra.mxu0 0.0
  %1660 = vmatprep.subr.mxu0 0.0
  %1661 = vmatpush1.msra.mxu0 0.0
  %1662 = vmatprep.subr.mxu0 0.0
  %1663 = vmatpush1.msra.mxu0 0.0
  %1664 = vmatprep.subr.mxu0 0.0
  %1665 = vmatpush1.msra.mxu0 0.0
  %1666 = vmatprep.subr.mxu0 0.0
  %1667 = vmatpush1.msra.mxu0 0.0
  %1668 = vmatprep.subr.mxu0 0.0
  %1669 = vmatpush1.msra.mxu0 0.0
  %1670 = vmatprep.subr.mxu0 0.0
  %1671 = vmatpush1.msra.mxu0 0.0
  %1672 = vmatprep.subr.mxu0 0.0
  %1673 = vmatpush1.msra.mxu0 0.0
  %1674 = vmatprep.subr.mxu0 0.0
  %1675 = vmatpush1.msra.mxu0 0.0
  %1676 = vmatprep.subr.mxu0 0.0
  %1677 = vmatpush1.msra.mxu0 0.0
  %1678 = vmatprep.subr.mxu0 0.0
  %1679 = vmatpush1.msra.mxu0 0.0
  %1680 = vmatprep.subr.mxu0 0.0
  %1681 = vmatpush1.msra.mxu0 0.0
  %1682 = vmatprep.subr.mxu0 0.0
  %1683 = vmatpush1.msra.mxu0 0.0
  %1684 = vmatprep.subr.mxu0 0.0
  %1685 = vmatpush1.msra.mxu0 0.0
  %1686 = vmatprep.subr.mxu0 0.0
  %1687 = vmatpush1.msra.mxu0 0.0
  %1688 = vmatprep.subr.mxu0 0.0
  %1689 = vmatpush1.msra.mxu0 0.0
  %1690 = vmatprep.subr.mxu0 0.0
  %1691 = vmatpush1.msra.mxu0 0.0
  %1692 = vmatprep.mubr.f32.mxu0 0.0
  %1693 = vmatmul.mubr.f32.gmra.mrb[0].mxu0 %v1623
  %v1694 = vpop.f32.mrb[0].mxu0
  %v1695 = vadd.f32 %v1614, %v1694
  %v1696 = vpop.f32.mrb[0].mxu0
  %1697 = vmatprep.mubr.f32.mxu0 0.0
  %1698 = vmatmul.mubr.f32.gmra.mrb[0].mxu0 %v1626
  %v1699 = vpop.f32.mrb[0].mxu0
  %v1700 = vadd.f32 %v1619, %v1699
  %v1701 = vpop.f32.mrb[0].mxu0
  %1702 = vdwg.mxu0
  %v1703 = vadd.f32 %v1034, %v1695
  %v1704 = vadd.f32 %v1035, %v1700
  %v1705 = vlaneseq
  %v1706 = vshrl.u32 %v1705, 7
  %v1707 = vsub.s32 1, %v1706
  %v1708 = vrot.slane %v1057, %v1707
  %v1709 = vadd.f32 %v1703, %v1708
  %v1710 = vadd.f32 %v1704, %v1708
  %v1711 = vsel %vm24, %v1709, 0.0
  %1712 = vadd.xlane.f32.xlu0 %v1711
  %v1713 = vpop.xlane.xlu0 %1712
  %v1714 = vsel %vm24, %v1710, 0.0
  %1715 = vadd.xlane.f32.xlu0 %v1714
  %v1716 = vpop.xlane.xlu0 %1715
  %v1717 = vmul.f32 %v1713, %v31
  %v1718 = vmul.f32 %v1716, %v31
  %v1719 = vsub.f32 %v1709, %v1717
  %v1720 = vsub.f32 %v1710, %v1718
  %v1721 = vmul.f32 %v1719, %v1719
  %v1722 = vmul.f32 %v1720, %v1720
  %v1723 = vsel %vm24, %v1721, 0.0
  %1724 = vadd.xlane.f32.xlu0 %v1723
  %v1725 = vpop.xlane.xlu0 %1724
  %v1726 = vsel %vm24, %v1722, 0.0
  %1727 = vadd.xlane.f32.xlu0 %v1726
  %v1728 = vpop.xlane.xlu0 %1727
  %v1729 = vmul.f32 %v1725, %v31
  %v1730 = vmul.f32 %v1728, %v31
  %v1731 = vadd.f32 %v1729, 1e-12
  %v1732 = vadd.f32 %v1730, 1e-12
  %v1733 = vrsqrt.pop %v1731
  %v1734 = vrsqrt.pop %v1732
  %v1735 = vmul.f32 %v1719, %v1733
  %v1736 = vmul.f32 %v1720, %v1734
  %v1737 = vlaneseq
  %v1738 = vshrl.u32 %v1737, 7
  %v1739 = vsub.s32 2, %v1738
  %v1740 = vrot.slane %v1057, %v1739
  %v1741 = vmul.f32 %v1735, %v1740
  %v1742 = vmul.f32 %v1736, %v1740
  %v1743 = vlaneseq
  %v1744 = vshrl.u32 %v1743, 7
  %v1745 = vsub.s32 3, %v1744
  %v1746 = vrot.slane %v1057, %v1745
  %v1747 = vadd.f32 %v1741, %v1746
  %v1748 = vadd.f32 %v1742, %v1746
  %v1749 = vlaneseq
  %v1750 = vshrl.u32 %v1749, 7
  %v1751 = vsub.s32 4, %v1750
  %v1752 = vrot.slane %v1057, %v1751
  %v1754 = vsel %vm24, %v1747, 0
  %v1757 = vsel %vm24, %v1748, 0
  %1759 = vmatprep.subr.mxu0 0.0
  %1760 = vmatpush1.msra.mxu0 %v1045
  %1761 = vmatprep.subr.mxu0 0.0
  %1762 = vmatpush1.msra.mxu0 %v1046
  %1763 = vmatprep.subr.mxu0 0.0
  %1764 = vmatpush1.msra.mxu0 %v1047
  %1765 = vmatprep.subr.mxu0 0.0
  %1766 = vmatpush1.msra.mxu0 %v1048
  %1767 = vmatprep.subr.mxu0 0.0
  %1768 = vmatpush1.msra.mxu0 0.0
  %1769 = vmatprep.subr.mxu0 0.0
  %1770 = vmatpush1.msra.mxu0 0.0
  %1771 = vmatprep.subr.mxu0 0.0
  %1772 = vmatpush1.msra.mxu0 0.0
  %1773 = vmatprep.subr.mxu0 0.0
  %1774 = vmatpush1.msra.mxu0 0.0
  %1775 = vmatprep.subr.mxu0 0.0
  %1776 = vmatpush1.msra.mxu0 0.0
  %1777 = vmatprep.subr.mxu0 0.0
  %1778 = vmatpush1.msra.mxu0 0.0
  %1779 = vmatprep.subr.mxu0 0.0
  %1780 = vmatpush1.msra.mxu0 0.0
  %1781 = vmatprep.subr.mxu0 0.0
  %1782 = vmatpush1.msra.mxu0 0.0
  %1783 = vmatprep.subr.mxu0 0.0
  %1784 = vmatpush1.msra.mxu0 0.0
  %1785 = vmatprep.subr.mxu0 0.0
  %1786 = vmatpush1.msra.mxu0 0.0
  %1787 = vmatprep.subr.mxu0 0.0
  %1788 = vmatpush1.msra.mxu0 0.0
  %1789 = vmatprep.subr.mxu0 0.0
  %1790 = vmatpush1.msra.mxu0 0.0
  %1791 = vmatprep.subr.mxu0 0.0
  %1792 = vmatpush1.msra.mxu0 0.0
  %1793 = vmatprep.subr.mxu0 0.0
  %1794 = vmatpush1.msra.mxu0 0.0
  %1795 = vmatprep.subr.mxu0 0.0
  %1796 = vmatpush1.msra.mxu0 0.0
  %1797 = vmatprep.subr.mxu0 0.0
  %1798 = vmatpush1.msra.mxu0 0.0
  %1799 = vmatprep.subr.mxu0 0.0
  %1800 = vmatpush1.msra.mxu0 0.0
  %1801 = vmatprep.subr.mxu0 0.0
  %1802 = vmatpush1.msra.mxu0 0.0
  %1803 = vmatprep.subr.mxu0 0.0
  %1804 = vmatpush1.msra.mxu0 0.0
  %1805 = vmatprep.subr.mxu0 0.0
  %1806 = vmatpush1.msra.mxu0 0.0
  %1807 = vmatprep.subr.mxu0 0.0
  %1808 = vmatpush1.msra.mxu0 0.0
  %1809 = vmatprep.subr.mxu0 0.0
  %1810 = vmatpush1.msra.mxu0 0.0
  %1811 = vmatprep.subr.mxu0 0.0
  %1812 = vmatpush1.msra.mxu0 0.0
  %1813 = vmatprep.subr.mxu0 0.0
  %1814 = vmatpush1.msra.mxu0 0.0
  %1815 = vmatprep.subr.mxu0 0.0
  %1816 = vmatpush1.msra.mxu0 0.0
  %1817 = vmatprep.subr.mxu0 0.0
  %1818 = vmatpush1.msra.mxu0 0.0
  %1819 = vmatprep.subr.mxu0 0.0
  %1820 = vmatpush1.msra.mxu0 0.0
  %1821 = vmatprep.subr.mxu0 0.0
  %1822 = vmatpush1.msra.mxu0 0.0
  %1823 = vmatprep.mubr.f32.mxu0 0.0
  %1824 = vmatmul.mubr.f32.gmra.mrb[0].mxu0 %v1754
  %v1825 = vpop.f32.mrb[0].mxu0
  %v1826 = vadd.f32 %v1752, %v1825
  %v1827 = vpop.f32.mrb[0].mxu0
  %1828 = vmatprep.mubr.f32.mxu0 0.0
  %1829 = vmatmul.mubr.f32.gmra.mrb[0].mxu0 %v1757
  %v1830 = vpop.f32.mrb[0].mxu0
  %v1831 = vadd.f32 %v1752, %v1830
  %v1832 = vpop.f32.mrb[0].mxu0
  %1833 = vdwg.mxu0
  %v1834 = vmul.f32 %v1826, %v1826
  %v1835 = vmul.f32 %v1831, %v1831
  %v1836 = vmul.f32 %v1826, %v1834
  %v1837 = vmul.f32 %v1831, %v1835
  %v1838 = vmul.f32 %v1836, 0.044715
  %v1839 = vmul.f32 %v1837, 0.044715
  %v1840 = vadd.f32 %v1826, %v1838
  %v1841 = vadd.f32 %v1831, %v1839
  %v1842 = vmul.f32 %v1840, 0.7978846
  %v1843 = vmul.f32 %v1841, 0.7978846
  %v1844 = vtanh.pop %v1842
  %v1845 = vtanh.pop %v1843
  %v1846 = vadd.f32 %v1844, 1.0
  %v1847 = vadd.f32 %v1845, 1.0
  %v1848 = vmul.f32 %v1846, 0.5
  %v1849 = vmul.f32 %v1847, 0.5
  %v1850 = vmul.f32 %v1826, %v1848
  %v1851 = vmul.f32 %v1831, %v1849
  %v1852 = vlaneseq
  %v1853 = vshrl.u32 %v1852, 7
  %v1854 = vsub.s32 5, %v1853
  %v1855 = vrot.slane %v1057, %v1854
  %v1857 = vsel %vm914, %v1850, 0
  %v1860 = vsel %vm914, %v1851, 0
  %1862 = vmatprep.subr.mxu0 0.0
  %1863 = vmatpush1.msra.mxu0 %v1049
  %1864 = vmatprep.subr.mxu0 0.0
  %1865 = vmatpush1.msra.mxu0 %v1050
  %1866 = vmatprep.subr.mxu0 0.0
  %1867 = vmatpush1.msra.mxu0 %v1051
  %1868 = vmatprep.subr.mxu0 0.0
  %1869 = vmatpush1.msra.mxu0 %v1052
  %1870 = vmatprep.subr.mxu0 0.0
  %1871 = vmatpush1.msra.mxu0 %v1053
  %1872 = vmatprep.subr.mxu0 0.0
  %1873 = vmatpush1.msra.mxu0 %v1054
  %1874 = vmatprep.subr.mxu0 0.0
  %1875 = vmatpush1.msra.mxu0 %v1055
  %1876 = vmatprep.subr.mxu0 0.0
  %1877 = vmatpush1.msra.mxu0 %v1056
  %1878 = vmatprep.subr.mxu0 0.0
  %1879 = vmatpush1.msra.mxu0 0.0
  %1880 = vmatprep.subr.mxu0 0.0
  %1881 = vmatpush1.msra.mxu0 0.0
  %1882 = vmatprep.subr.mxu0 0.0
  %1883 = vmatpush1.msra.mxu0 0.0
  %1884 = vmatprep.subr.mxu0 0.0
  %1885 = vmatpush1.msra.mxu0 0.0
  %1886 = vmatprep.subr.mxu0 0.0
  %1887 = vmatpush1.msra.mxu0 0.0
  %1888 = vmatprep.subr.mxu0 0.0
  %1889 = vmatpush1.msra.mxu0 0.0
  %1890 = vmatprep.subr.mxu0 0.0
  %1891 = vmatpush1.msra.mxu0 0.0
  %1892 = vmatprep.subr.mxu0 0.0
  %1893 = vmatpush1.msra.mxu0 0.0
  %1894 = vmatprep.subr.mxu0 0.0
  %1895 = vmatpush1.msra.mxu0 0.0
  %1896 = vmatprep.subr.mxu0 0.0
  %1897 = vmatpush1.msra.mxu0 0.0
  %1898 = vmatprep.subr.mxu0 0.0
  %1899 = vmatpush1.msra.mxu0 0.0
  %1900 = vmatprep.subr.mxu0 0.0
  %1901 = vmatpush1.msra.mxu0 0.0
  %1902 = vmatprep.subr.mxu0 0.0
  %1903 = vmatpush1.msra.mxu0 0.0
  %1904 = vmatprep.subr.mxu0 0.0
  %1905 = vmatpush1.msra.mxu0 0.0
  %1906 = vmatprep.subr.mxu0 0.0
  %1907 = vmatpush1.msra.mxu0 0.0
  %1908 = vmatprep.subr.mxu0 0.0
  %1909 = vmatpush1.msra.mxu0 0.0
  %1910 = vmatprep.subr.mxu0 0.0
  %1911 = vmatpush1.msra.mxu0 0.0
  %1912 = vmatprep.subr.mxu0 0.0
  %1913 = vmatpush1.msra.mxu0 0.0
  %1914 = vmatprep.subr.mxu0 0.0
  %1915 = vmatpush1.msra.mxu0 0.0
  %1916 = vmatprep.subr.mxu0 0.0
  %1917 = vmatpush1.msra.mxu0 0.0
  %1918 = vmatprep.subr.mxu0 0.0
  %1919 = vmatpush1.msra.mxu0 0.0
  %1920 = vmatprep.subr.mxu0 0.0
  %1921 = vmatpush1.msra.mxu0 0.0
  %1922 = vmatprep.subr.mxu0 0.0
  %1923 = vmatpush1.msra.mxu0 0.0
  %1924 = vmatprep.subr.mxu0 0.0
  %1925 = vmatpush1.msra.mxu0 0.0
  %1926 = vmatprep.mubr.f32.mxu0 0.0
  %1927 = vmatmul.mubr.f32.gmra.mrb[0].mxu0 %v1857
  %v1928 = vpop.f32.mrb[0].mxu0
  %v1929 = vadd.f32 %v1855, %v1928
  %v1930 = vpop.f32.mrb[0].mxu0
  %1931 = vmatprep.mubr.f32.mxu0 0.0
  %1932 = vmatmul.mubr.f32.gmra.mrb[0].mxu0 %v1860
  %v1933 = vpop.f32.mrb[0].mxu0
  %v1934 = vadd.f32 %v1855, %v1933
  %v1935 = vpop.f32.mrb[0].mxu0
  %1936 = vdwg.mxu0
  %v1937 = vadd.f32 %v1747, %v1929
  %v1938 = vadd.f32 %v1748, %v1934
  %v1939 = vsel %vm24, %v1937, 0.0
  %1940 = vadd.xlane.f32.xlu0 %v1939
  %v1941 = vpop.xlane.xlu0 %1940
  %v1942 = vsel %vm24, %v1938, 0.0
  %1943 = vadd.xlane.f32.xlu0 %v1942
  %v1944 = vpop.xlane.xlu0 %1943
  %v1945 = vmul.f32 %v1941, %v31
  %v1946 = vmul.f32 %v1944, %v31
  %v1947 = vsub.f32 %v1937, %v1945
  %v1948 = vsub.f32 %v1938, %v1946
  %v1949 = vmul.f32 %v1947, %v1947
  %v1950 = vmul.f32 %v1948, %v1948
  %v1951 = vsel %vm24, %v1949, 0.0
  %1952 = vadd.xlane.f32.xlu0 %v1951
  %v1953 = vpop.xlane.xlu0 %1952
  %v1954 = vsel %vm24, %v1950, 0.0
  %1955 = vadd.xlane.f32.xlu0 %v1954
  %v1956 = vpop.xlane.xlu0 %1955
  %v1957 = vmul.f32 %v1953, %v31
  %v1958 = vmul.f32 %v1956, %v31
  %v1959 = vadd.f32 %v1957, 1e-12
  %v1960 = vadd.f32 %v1958, 1e-12
  %v1961 = vrsqrt.pop %v1959
  %v1962 = vrsqrt.pop %v1960
  %v1963 = vmul.f32 %v1947, %v1961
  %v1964 = vmul.f32 %v1948, %v1962
  %v1965 = vlaneseq
  %v1966 = vshrl.u32 %v1965, 7
  %v1967 = vsub.s32 6, %v1966
  %v1968 = vrot.slane %v1057, %v1967
  %v1969 = vmul.f32 %v1963, %v1968
  %v1970 = vmul.f32 %v1964, %v1968
  %v1971 = vlaneseq
  %v1972 = vshrl.u32 %v1971, 7
  %v1973 = vsub.s32 7, %v1972
  %v1974 = vrot.slane %v1057, %v1973
  %v1975 = vadd.f32 %v1969, %v1974
  %v1976 = vadd.f32 %v1970, %v1974
  %v1977 = vmul.u32 %v65, 8
  %vm1978 = vcmp.eq.s32.totalorder %v70, %v1977
  %v1979 = vsel %vm1978, 1, 0
  %v1980 = vcvt.s32.f32 %v1979
  %v1982 = vsel %vm206, %v1980, 0
  %1984 = vmatprep.subr.mxu0 0.0
  %1985 = vmatpush1.msra.mxu0 %v1975
  %1986 = vmatprep.subr.mxu0 0.0
  %1987 = vmatpush1.msra.mxu0 %v1976
  %1988 = vmatprep.subr.mxu0 0.0
  %1989 = vmatpush1.msra.mxu0 0.0
  %1990 = vmatprep.subr.mxu0 0.0
  %1991 = vmatpush1.msra.mxu0 0.0
  %1992 = vmatprep.subr.mxu0 0.0
  %1993 = vmatpush1.msra.mxu0 0.0
  %1994 = vmatprep.subr.mxu0 0.0
  %1995 = vmatpush1.msra.mxu0 0.0
  %1996 = vmatprep.subr.mxu0 0.0
  %1997 = vmatpush1.msra.mxu0 0.0
  %1998 = vmatprep.subr.mxu0 0.0
  %1999 = vmatpush1.msra.mxu0 0.0
  %2000 = vmatprep.subr.mxu0 0.0
  %2001 = vmatpush1.msra.mxu0 0.0
  %2002 = vmatprep.subr.mxu0 0.0
  %2003 = vmatpush1.msra.mxu0 0.0
  %2004 = vmatprep.subr.mxu0 0.0
  %2005 = vmatpush1.msra.mxu0 0.0
  %2006 = vmatprep.subr.mxu0 0.0
  %2007 = vmatpush1.msra.mxu0 0.0
  %2008 = vmatprep.subr.mxu0 0.0
  %2009 = vmatpush1.msra.mxu0 0.0
  %2010 = vmatprep.subr.mxu0 0.0
  %2011 = vmatpush1.msra.mxu0 0.0
  %2012 = vmatprep.subr.mxu0 0.0
  %2013 = vmatpush1.msra.mxu0 0.0
  %2014 = vmatprep.subr.mxu0 0.0
  %2015 = vmatpush1.msra.mxu0 0.0
  %2016 = vmatprep.subr.mxu0 0.0
  %2017 = vmatpush1.msra.mxu0 0.0
  %2018 = vmatprep.subr.mxu0 0.0
  %2019 = vmatpush1.msra.mxu0 0.0
  %2020 = vmatprep.subr.mxu0 0.0
  %2021 = vmatpush1.msra.mxu0 0.0
  %2022 = vmatprep.subr.mxu0 0.0
  %2023 = vmatpush1.msra.mxu0 0.0
  %2024 = vmatprep.subr.mxu0 0.0
  %2025 = vmatpush1.msra.mxu0 0.0
  %2026 = vmatprep.subr.mxu0 0.0
  %2027 = vmatpush1.msra.mxu0 0.0
  %2028 = vmatprep.subr.mxu0 0.0
  %2029 = vmatpush1.msra.mxu0 0.0
  %2030 = vmatprep.subr.mxu0 0.0
  %2031 = vmatpush1.msra.mxu0 0.0
  %2032 = vmatprep.subr.mxu0 0.0
  %2033 = vmatpush1.msra.mxu0 0.0
  %2034 = vmatprep.subr.mxu0 0.0
  %2035 = vmatpush1.msra.mxu0 0.0
  %2036 = vmatprep.subr.mxu0 0.0
  %2037 = vmatpush1.msra.mxu0 0.0
  %2038 = vmatprep.subr.mxu0 0.0
  %2039 = vmatpush1.msra.mxu0 0.0
  %2040 = vmatprep.subr.mxu0 0.0
  %2041 = vmatpush1.msra.mxu0 0.0
  %2042 = vmatprep.subr.mxu0 0.0
  %2043 = vmatpush1.msra.mxu0 0.0
  %2044 = vmatprep.subr.mxu0 0.0
  %2045 = vmatpush1.msra.mxu0 0.0
  %2046 = vmatprep.subr.mxu0 0.0
  %2047 = vmatpush1.msra.mxu0 0.0
  %2048 = vmatprep.mubr.f32.mxu0 0.0
  %2049 = vmatmul.mubr.f32.gmra.mrb[0].mxu0 %v1982
  %v2050 = vpop.f32.mrb[0].mxu0
  %v2051 = vadd.f32 0.0, %v2050
  %v2052 = vpop.f32.mrb[0].mxu0
  %2053 = vdwg.mxu0
  %v2054 = vlaneseq
  %v2055 = vshrl.u32 %v2054, 7
  %v2056 = vsub.s32 2, %v2055
  %v2057 = vrot.slane %v21, %v2056
  %v2059 = vsel %vm24, %v2051, 0
  %2061 = vmatprep.subr.mxu0 0.0
  %2062 = vmatpush1.msra.mxu0 %v17
  %2063 = vmatprep.subr.mxu0 0.0
  %2064 = vmatpush1.msra.mxu0 %v18
  %2065 = vmatprep.subr.mxu0 0.0
  %2066 = vmatpush1.msra.mxu0 %v19
  %2067 = vmatprep.subr.mxu0 0.0
  %2068 = vmatpush1.msra.mxu0 %v20
  %2069 = vmatprep.subr.mxu0 0.0
  %2070 = vmatpush1.msra.mxu0 0.0
  %2071 = vmatprep.subr.mxu0 0.0
  %2072 = vmatpush1.msra.mxu0 0.0
  %2073 = vmatprep.subr.mxu0 0.0
  %2074 = vmatpush1.msra.mxu0 0.0
  %2075 = vmatprep.subr.mxu0 0.0
  %2076 = vmatpush1.msra.mxu0 0.0
  %2077 = vmatprep.subr.mxu0 0.0
  %2078 = vmatpush1.msra.mxu0 0.0
  %2079 = vmatprep.subr.mxu0 0.0
  %2080 = vmatpush1.msra.mxu0 0.0
  %2081 = vmatprep.subr.mxu0 0.0
  %2082 = vmatpush1.msra.mxu0 0.0
  %2083 = vmatprep.subr.mxu0 0.0
  %2084 = vmatpush1.msra.mxu0 0.0
  %2085 = vmatprep.subr.mxu0 0.0
  %2086 = vmatpush1.msra.mxu0 0.0
  %2087 = vmatprep.subr.mxu0 0.0
  %2088 = vmatpush1.msra.mxu0 0.0
  %2089 = vmatprep.subr.mxu0 0.0
  %2090 = vmatpush1.msra.mxu0 0.0
  %2091 = vmatprep.subr.mxu0 0.0
  %2092 = vmatpush1.msra.mxu0 0.0
  %2093 = vmatprep.subr.mxu0 0.0
  %2094 = vmatpush1.msra.mxu0 0.0
  %2095 = vmatprep.subr.mxu0 0.0
  %2096 = vmatpush1.msra.mxu0 0.0
  %2097 = vmatprep.subr.mxu0 0.0
  %2098 = vmatpush1.msra.mxu0 0.0
  %2099 = vmatprep.subr.mxu0 0.0
  %2100 = vmatpush1.msra.mxu0 0.0
  %2101 = vmatprep.subr.mxu0 0.0
  %2102 = vmatpush1.msra.mxu0 0.0
  %2103 = vmatprep.subr.mxu0 0.0
  %2104 = vmatpush1.msra.mxu0 0.0
  %2105 = vmatprep.subr.mxu0 0.0
  %2106 = vmatpush1.msra.mxu0 0.0
  %2107 = vmatprep.subr.mxu0 0.0
  %2108 = vmatpush1.msra.mxu0 0.0
  %2109 = vmatprep.subr.mxu0 0.0
  %2110 = vmatpush1.msra.mxu0 0.0
  %2111 = vmatprep.subr.mxu0 0.0
  %2112 = vmatpush1.msra.mxu0 0.0
  %2113 = vmatprep.subr.mxu0 0.0
  %2114 = vmatpush1.msra.mxu0 0.0
  %2115 = vmatprep.subr.mxu0 0.0
  %2116 = vmatpush1.msra.mxu0 0.0
  %2117 = vmatprep.subr.mxu0 0.0
  %2118 = vmatpush1.msra.mxu0 0.0
  %2119 = vmatprep.subr.mxu0 0.0
  %2120 = vmatpush1.msra.mxu0 0.0
  %2121 = vmatprep.subr.mxu0 0.0
  %2122 = vmatpush1.msra.mxu0 0.0
  %2123 = vmatprep.subr.mxu0 0.0
  %2124 = vmatpush1.msra.mxu0 0.0
  %2125 = vmatprep.mubr.f32.mxu0 0.0
  %2126 = vmatmul.mubr.f32.gmra.mrb[0].mxu0 %v2059
  %v2127 = vpop.f32.mrb[0].mxu0
  %v2128 = vadd.f32 %v2057, %v2127
  %v2129 = vpop.f32.mrb[0].mxu0
  %2130 = vdwg.mxu0
  %2131 = vst [vmem:[%s4] sm:$0xff] %v2128
  // Predicated region
  $region18: #{liberty_predictor_forward.1} parent=0 // pred_check
    _
  $region19: #{liberty_predictor_forward.1} parent=0 // pred_check_branch
    %2133 = sbr.rel (0) target = $region21
  $region20: #{liberty_predictor_forward.1} parent=0 // pred_region
    _
  $region21: #{liberty_predictor_forward.1} parent=0 // pred_fallthru
    _
  // Predicated region
  $region22: #{liberty_predictor_forward.1} parent=0 // pred_check
    _
  $region23: #{liberty_predictor_forward.1} parent=0 // pred_check_branch
    %2135 = sbr.rel (0) target = $region25
  $region24: #{liberty_predictor_forward.1} parent=0 // pred_region
    _
  $region25: #{liberty_predictor_forward.1} parent=0 // pred_fallthru
    _

</llo_original>
